<compile_context>
chip_gen: v5e
topology: v5e:2x2
jax: 0.10.0
libtpu: 0.0.40
codegen_flags: <defaults>
</compile_context>

<pallas_src>
import functools
import math

import numpy as np
import jax
import jax.numpy as jnp
from jax import lax
from jax.experimental import pallas as pl
from jax.experimental.pallas import tpu as pltpu

NUM_GROUPS = 32
EPS = 1e-6


def attn_block_kernel(x_ref, mask_ref, gt_ref, wqkv_ref, wp_ref, b_ref,
                      o_ref, q_sc, k_sc, v_sc, *, true_w, tq, masked):
    qi = pl.program_id(1)
    C = x_ref.shape[1]
    Wp = x_ref.shape[2]
    C3 = 3 * C
    b_all = b_ref[...]                                            # (4C, 1) f32

    # ---- per-batch prologue (qi == 0): GroupNorm stats + fused QKV ----
    @pl.when(qi == 0)
    def _():
        x = x_ref[0]                                              # (C, Wp); cols >= true_w are 0
        n = (C // NUM_GROUPS) * true_w
        gt = gt_ref[...]                                          # (C, 32) one-hot group map
        # one-pass stats (E[x^2]-E[x]^2, f32); fine for normalized activations
        stats = jnp.concatenate(
            [jnp.sum(x, axis=-1, keepdims=True),
             jnp.sum(x * x, axis=-1, keepdims=True)], axis=-1)                 # (C, 2)
        grp = lax.dot_general(gt, stats, (((0,), (0,)), ((), ())),
                              preferred_element_type=jnp.float32) * (1.0 / n)  # (32, 2)
        mean_g = grp[:, 0:1]
        inv_g = lax.rsqrt(grp[:, 1:2] - mean_g * mean_g + EPS)
        # fused broadcast-back: single (C,32)@(32,2) matmul -> [mean_c, inv_c]
        perch = jnp.dot(gt, jnp.concatenate([mean_g, inv_g], axis=-1),
                        preferred_element_type=jnp.float32)                    # (C, 2)
        xhat = (x - perch[:, 0:1]) * perch[:, 1:2]                             # (C, Wp) f32
        # fused q/k/v projection (GroupNorm affine and C^-0.5 folded into W/b);
        # bf16 MXU operands, f32 accumulation.
        qkv = jnp.dot(wqkv_ref[...], xhat.astype(jnp.bfloat16),
                      preferred_element_type=jnp.float32) + b_all[0:C3]        # (3C, Wp)
        q_sc[...] = qkv[0:C].astype(jnp.bfloat16)
        k_sc[...] = qkv[C:2 * C].astype(jnp.bfloat16)
        v_sc[...] = qkv[2 * C:C3].astype(jnp.bfloat16)

    # ---- flash-style query tile: TQ queries vs. all Wp keys ----
    q0 = pl.multiple_of(qi * tq, 128)
    q_t = q_sc[:, pl.ds(q0, tq)]                                               # (C, TQ) bf16
    # s = q_t^T k : trans_a dot form (MXU consumes the transposed operand;
    # no (Wp,Wp) materialization, no JAX-level transpose).
    s = lax.dot_general(q_t, k_sc[...], (((0,), (0,)), ((), ())),
                        preferred_element_type=jnp.float32)                    # (TQ, Wp) f32
    if masked:
        s = s + mask_ref[...]                       # additive key mask (0 / -1e30)
    s = s - jnp.max(s, axis=-1, keepdims=True)
    p = jnp.exp(s)                                                             # (TQ, Wp) f32
    p16 = p.astype(jnp.bfloat16)
    # unnormalized PV (trans_b dot form)
    h2 = lax.dot_general(v_sc[...], p16, (((1,), (1,)), ((), ())),
                         preferred_element_type=jnp.float32)                   # (C, TQ) f32
    # deferred softmax normalization: row sums via a tiny ones@p^T matmul so
    # the per-query scale is already lane-oriented (1, TQ).
    lsum = lax.dot_general(jnp.ones((8, Wp), jnp.bfloat16), p16,
                           (((1,), (1,)), ((), ())),
                           preferred_element_type=jnp.float32)[0:1]            # (1, TQ)
    h2 = h2 * pl.reciprocal(lsum, approx=True)
    # output projection + residual for this query slab
    out = jnp.dot(wp_ref[...], h2.astype(jnp.bfloat16),
                  preferred_element_type=jnp.float32) + b_all[C3:]             # (C, TQ)
    o_ref[0] = x_ref[0, :, pl.ds(q0, tq)] + out


def _pick_tq(wp):
    # largest query tile (multiple of 128, <= 512) that divides the padded width
    for t in (512, 384, 256, 128):
        if wp % t == 0:
            return t
    return 128


def _vmem_budget_bytes(C, Wp, TQ):
    f32, bf16 = 4, 2
    b = 2 * C * Wp * f32                                  # x blocks (double-buffered)
    b += 2 * C * TQ * f32                                 # out blocks (double-buffered)
    b += 3 * C * Wp * bf16                                # q/k/v scratch (bf16)
    b += 4 * C * C * bf16                                 # wqkv + wproj (single-buffered)
    b += C * NUM_GROUPS * f32 + Wp * f32 + 4 * C * 128 * f32   # gt, mask, padded biases
    b += 2 * TQ * Wp * f32                                # s and p tiles
    b += 4 * C * Wp * f32                                 # xhat + qkv f32 at qi==0
    return b


@jax.jit
def attn_block(x, params):
    """x: (B, C, W) float32. params: dict (see init_params). Returns (B, C, W)."""
    B, C, W = x.shape
    assert C % NUM_GROUPS == 0
    Wp = ((W + 127) // 128) * 128          # lane-dense padded width
    TQ = _pick_tq(Wp)
    NQ = Wp // TQ
    masked = Wp != W

    # --- wrapper-side exact parameter refolding (traced once under jit) ---
    scale = float(C) ** (-0.5)
    gamma_row = params["gamma"].reshape(1, C)
    beta_col = params["beta"].reshape(C, 1)

    def fold(w, bias, s):
        # W @ (xhat*gamma + beta) + b  ==  (W*gamma^T) @ xhat + (W@beta + b)
        return (w * gamma_row) * s, (jnp.dot(w, beta_col) + bias) * s

    wq, bq = fold(params["wq"], params["bq"], scale)   # C^-0.5 folded into q path
    wk, bk = fold(params["wk"], params["bk"], 1.0)
    wv, bv = fold(params["wv"], params["bv"], 1.0)
    wqkv = jnp.concatenate([wq, wk, wv], axis=0).astype(jnp.bfloat16)   # (3C, C) bf16
    wproj = params["wp"].astype(jnp.bfloat16)                           # (C, C) bf16
    b_all = jnp.concatenate([bq, bk, bv, params["bp"]], axis=0)         # (4C, 1) f32

    # transposed one-hot group map (C, 32): GT[c, g] = 1 iff channel c in group g
    gsz = C // NUM_GROUPS
    gt_np = np.zeros((C, NUM_GROUPS), np.float32)
    for g in range(NUM_GROUPS):
        gt_np[g * gsz:(g + 1) * gsz, g] = 1.0
    gt = jnp.asarray(gt_np)

    # additive key mask row: 0 for real keys, -1e30 for padded keys
    mask = jnp.where(jnp.arange(Wp) < W, 0.0, -1e30).astype(jnp.float32).reshape(1, Wp)

    x_pad = x if not masked else jnp.pad(x, ((0, 0), (0, 0), (0, Wp - W)))

    def const(shape):
        # constant operands: never change across the grid -> single-buffer them
        return pl.BlockSpec(shape, lambda b, q: (0,) * len(shape),
                            pipeline_mode=pl.Buffered(1))

    vmem_limit = int(min(max(2 * _vmem_budget_bytes(C, Wp, TQ), 32 * 2**20),
                         128 * 2**20))

    # TODO(synk): small-C regime (C <= 128): pack several batch elements per grid
    # step ((C, Bt*Wp) QKV matmul) to fill the MXU K/N dims on v5e/v6e.
    out = pl.pallas_call(
        functools.partial(attn_block_kernel, true_w=W, tq=TQ, masked=masked),
        out_shape=jax.ShapeDtypeStruct((B, C, Wp), jnp.float32),
        grid_spec=pltpu.PrefetchScalarGridSpec(
            num_scalar_prefetch=0,
            grid=(B, NQ),
            in_specs=[
                pl.BlockSpec((1, C, Wp), lambda b, q: (b, 0, 0)),  # x (zero-padded width)
                const((1, Wp)),                                    # additive key mask
                const((C, NUM_GROUPS)),                            # transposed group map
                const((3 * C, C)),                                 # fused Wqkv (bf16)
                const((C, C)),                                     # W_proj (bf16)
                const((4 * C, 1)),                                 # packed biases [bq;bk;bv;bp]
            ],
            out_specs=pl.BlockSpec((1, C, TQ), lambda b, q: (b, 0, q)),
            scratch_shapes=[pltpu.VMEM((C, Wp), jnp.bfloat16)] * 3,  # q/k/v resident per batch
        ),
        input_output_aliases={0: 0},               # reuse the padded-x HBM buffer
        compiler_params=pltpu.CompilerParams(
            # batch axis parallel (megacore); query axis "arbitrary" because the
            # q/k/v scratch is carried across it.
            # TODO(synk): for v7x with tiny B, recompute k/v per tile (no carried
            # state) so the query axis can also be marked "parallel".
            dimension_semantics=("parallel", "arbitrary"),
            vmem_limit_bytes=vmem_limit),
    )(x_pad, mask, gt, wqkv, wproj, b_all)

    return out if not masked else out[:, :, :W]


def init_params(key, C):
    """Deterministic init. PyTorch defaults gamma=1/beta=0; randomized slightly
    here so the wrapper-side affine folding path is actually exercised."""
    ks = jax.random.split(key, 10)
    bound = 1.0 / math.sqrt(C)
    u = lambda k, shape, lo, hi: jax.random.uniform(k, shape, jnp.float32, lo, hi)
    return {
        "gamma": u(ks[8], (C, 1), 0.5, 1.5),
        "beta": u(ks[9], (C, 1), -0.5, 0.5),
        "wq": u(ks[0], (C, C), -bound, bound), "bq": u(ks[1], (C, 1), -bound, bound),
        "wk": u(ks[2], (C, C), -bound, bound), "bk": u(ks[3], (C, 1), -bound, bound),
        "wv": u(ks[4], (C, C), -bound, bound), "bv": u(ks[5], (C, 1), -bound, bound),
        "wp": u(ks[6], (C, C), -bound, bound), "bp": u(ks[7], (C, 1), -bound, bound),
    }


def attn_block_ref(x, params):
    """Pure-JAX f32 reference (matches the PyTorch module)."""
    B, C, W = x.shape
    gs = C // NUM_GROUPS
    xg = x.reshape(B, NUM_GROUPS, gs * W)
    mean = xg.mean(-1, keepdims=True)
    var = ((xg - mean) ** 2).mean(-1, keepdims=True)
    h = ((xg - mean) / jnp.sqrt(var + EPS)).reshape(B, C, W)
    h = h * params["gamma"].reshape(1, C, 1) + params["beta"].reshape(1, C, 1)

    proj = lambda wname, bname: (jnp.einsum("oc,bcw->bow", params[wname], h)
                                 + params[bname].reshape(1, C, 1))
    q, k, v = proj("wq", "bq"), proj("wk", "bk"), proj("wv", "bv")
    attn = jnp.einsum("bcq,bck->bqk", q, k) * (int(C) ** (-0.5))
    attn = jax.nn.softmax(attn, axis=2)
    h2 = jnp.einsum("bcj,bij->bci", v, attn)
    out = jnp.einsum("oc,bcw->bow", params["wp"], h2) + params["bp"].reshape(1, C, 1)
    return x + out


if __name__ == "__main__":
    # second case exercises multiple query tiles (NQ > 1) and the unpadded path
    cases = [(2, 64, 16), (2, 64, 640)]
    root = jax.random.PRNGKey(0)
    for idx, (B, C, W) in enumerate(cases):
        kx, kp = jax.random.split(jax.random.fold_in(root, idx))
        x = jax.random.normal(kx, (B, C, W), jnp.float32)
        params = init_params(kp, C)

        out = jax.block_until_ready(attn_block(x, params))
        ref = jax.block_until_ready(attn_block_ref(x, params))

        # bf16 MXU operands (f32 accumulation) + approximate EUP reciprocal in
        # the deferred softmax normalization -> errors at the few-1e-3 level;
        # 2e-2 tolerance gives comfortable headroom.
        np.testing.assert_allclose(np.asarray(out), np.asarray(ref),
                                   rtol=2e-2, atol=2e-2)

    print("KERNEL_OK")
</pallas_src>

<mosaic_0001>
module attributes {stable_mosaic.version = 11 : i64} {
  func.func @attn_block_kernel(%arg0: i32, %arg1: i32, %arg2: memref<1x64x128xf32, #tpu.memory_space<vmem>>, %arg3: memref<1x128xf32, #tpu.memory_space<vmem>>, %arg4: memref<64x32xf32, #tpu.memory_space<vmem>>, %arg5: memref<192x64xbf16, #tpu.memory_space<vmem>>, %arg6: memref<64x64xbf16, #tpu.memory_space<vmem>>, %arg7: memref<256x1xf32, #tpu.memory_space<vmem>>, %arg8: memref<1x64x128xf32, #tpu.memory_space<vmem>>, %arg9: memref<64x128xbf16, #tpu.memory_space<vmem>>, %arg10: memref<64x128xbf16, #tpu.memory_space<vmem>>, %arg11: memref<64x128xbf16, #tpu.memory_space<vmem>>) attributes {dimension_semantics = [#tpu.dimension_semantics<parallel>, #tpu.dimension_semantics<arbitrary>], iteration_bounds = array<i64: 2, 1>, scalar_prefetch = 0 : i64, scratch_operands = 3 : i64, tpu.core_type = #tpu.core_type<tc>, window_params = [{transform_indices = @transform_0, window_bounds = array<i64: 1, 64, 128>}, {pipeline_mode = #tpu.pipeline_mode<synchronous>, transform_indices = @transform_1, window_bounds = array<i64: 1, 128>}, {pipeline_mode = #tpu.pipeline_mode<synchronous>, transform_indices = @transform_2, window_bounds = array<i64: 64, 32>}, {pipeline_mode = #tpu.pipeline_mode<synchronous>, transform_indices = @transform_3, window_bounds = array<i64: 192, 64>}, {pipeline_mode = #tpu.pipeline_mode<synchronous>, transform_indices = @transform_4, window_bounds = array<i64: 64, 64>}, {pipeline_mode = #tpu.pipeline_mode<synchronous>, transform_indices = @transform_5, window_bounds = array<i64: 256, 1>}, {transform_indices = @transform_6, window_bounds = array<i64: 1, 64, 128>}]} {
    %c0 = arith.constant 0 : index
    %c0_0 = arith.constant 0 : index
    %0 = vector.load %arg7[%c0, %c0_0] : memref<256x1xf32, #tpu.memory_space<vmem>>, vector<256x1xf32>
    %c0_i32 = arith.constant 0 : i32
    %1 = arith.cmpi eq, %arg1, %c0_i32 : i32
    %2 = arith.extui %1 : i1 to i32
    %c0_i32_1 = arith.constant 0 : i32
    %3 = arith.cmpi ne, %2, %c0_i32_1 : i32
    scf.if %3 {
      %c0_21 = arith.constant 0 : index
      %c0_22 = arith.constant 0 : index
      %c0_23 = arith.constant 0 : index
      %40 = vector.load %arg2[%c0_21, %c0_22, %c0_23] : memref<1x64x128xf32, #tpu.memory_space<vmem>>, vector<1x64x128xf32>
      %41 = vector.shape_cast %40 : vector<1x64x128xf32> to vector<64x128xf32>
      %c0_24 = arith.constant 0 : index
      %c0_25 = arith.constant 0 : index
      %42 = vector.load %arg4[%c0_24, %c0_25] : memref<64x32xf32, #tpu.memory_space<vmem>>, vector<64x32xf32>
      %cst_26 = arith.constant dense<0.000000e+00> : vector<64xf32>
      %43 = vector.multi_reduction <add>, %41, %cst_26 [1] : vector<64x128xf32> to vector<64xf32>
      %44 = vector.shape_cast %43 : vector<64xf32> to vector<64x1xf32>
      %45 = arith.mulf %41, %41 : vector<64x128xf32>
      %cst_27 = arith.constant dense<0.000000e+00> : vector<64xf32>
      %46 = vector.multi_reduction <add>, %45, %cst_27 [1] : vector<64x128xf32> to vector<64xf32>
      %47 = vector.shape_cast %46 : vector<64xf32> to vector<64x1xf32>
      %48 = tpu.concatenate %44, %47 in 1 : vector<64x1xf32>, vector<64x1xf32> -> vector<64x2xf32>
      %cst_28 = arith.constant dense<0.000000e+00> : vector<32x2xf32>
      %49 = tpu.matmul %42, %48, %cst_28 {dimension_numbers = #tpu.dot_dimension_numbers<[0], [0], [1], [1], [0, 1, 1, 1], [], []>} : vector<64x32xf32>, vector<64x2xf32>, vector<32x2xf32> -> vector<32x2xf32>
      %cst_29 = arith.constant 3.125000e-02 : f32
      %50 = vector.broadcast %cst_29 : f32 to vector<32x2xf32>
      %51 = arith.mulf %49, %50 : vector<32x2xf32>
      %52 = vector.extract_strided_slice %51 {offsets = [0, 0], sizes = [32, 1], strides = [1, 1]} : vector<32x2xf32> to vector<32x1xf32>
      %53 = vector.extract_strided_slice %51 {offsets = [0, 1], sizes = [32, 1], strides = [1, 1]} : vector<32x2xf32> to vector<32x1xf32>
      %54 = arith.mulf %52, %52 : vector<32x1xf32>
      %55 = arith.subf %53, %54 : vector<32x1xf32>
      %cst_30 = arith.constant 9.99999997E-7 : f32
      %56 = vector.broadcast %cst_30 : f32 to vector<32x1xf32>
      %57 = arith.addf %55, %56 : vector<32x1xf32>
      %58 = math.rsqrt %57 : vector<32x1xf32>
      %59 = tpu.concatenate %52, %58 in 1 : vector<32x1xf32>, vector<32x1xf32> -> vector<32x2xf32>
      %cst_31 = arith.constant dense<0.000000e+00> : vector<64x2xf32>
      %60 = tpu.matmul %42, %59, %cst_31 {dimension_numbers = #tpu.dot_dimension_numbers<[1], [0], [0], [1], [0, 0, 1, 1], [], []>} : vector<64x32xf32>, vector<32x2xf32>, vector<64x2xf32> -> vector<64x2xf32>
      %61 = vector.extract_strided_slice %60 {offsets = [0, 0], sizes = [64, 1], strides = [1, 1]} : vector<64x2xf32> to vector<64x1xf32>
      %62 = vector.broadcast %61 : vector<64x1xf32> to vector<64x128xf32>
      %63 = arith.subf %41, %62 : vector<64x128xf32>
      %64 = vector.extract_strided_slice %60 {offsets = [0, 1], sizes = [64, 1], strides = [1, 1]} : vector<64x2xf32> to vector<64x1xf32>
      %65 = vector.broadcast %64 : vector<64x1xf32> to vector<64x128xf32>
      %66 = arith.mulf %63, %65 : vector<64x128xf32>
      %c0_32 = arith.constant 0 : index
      %c0_33 = arith.constant 0 : index
      %67 = vector.load %arg5[%c0_32, %c0_33] : memref<192x64xbf16, #tpu.memory_space<vmem>>, vector<192x64xbf16>
      %68 = arith.truncf %66 : vector<64x128xf32> to vector<64x128xbf16>
      %cst_34 = arith.constant dense<0.000000e+00> : vector<192x128xf32>
      %69 = tpu.matmul %67, %68, %cst_34 {dimension_numbers = #tpu.dot_dimension_numbers<[1], [0], [0], [1], [0, 0, 1, 1], [], []>} : vector<192x64xbf16>, vector<64x128xbf16>, vector<192x128xf32> -> vector<192x128xf32>
      %70 = vector.extract_strided_slice %0 {offsets = [0, 0], sizes = [192, 1], strides = [1, 1]} : vector<256x1xf32> to vector<192x1xf32>
      %71 = vector.broadcast %70 : vector<192x1xf32> to vector<192x128xf32>
      %72 = arith.addf %69, %71 : vector<192x128xf32>
      %73 = vector.extract_strided_slice %72 {offsets = [0, 0], sizes = [64, 128], strides = [1, 1]} : vector<192x128xf32> to vector<64x128xf32>
      %74 = arith.truncf %73 : vector<64x128xf32> to vector<64x128xbf16>
      %c0_35 = arith.constant 0 : index
      %c0_36 = arith.constant 0 : index
      %75 = vector.load %arg9[%c0_35, %c0_36] : memref<64x128xbf16, #tpu.memory_space<vmem>>, vector<64x128xbf16>
      tpu.vector_store %arg9[%c0_35, %c0_36], %74 {strides = array<i32>} : memref<64x128xbf16, #tpu.memory_space<vmem>>, vector<64x128xbf16>,
      %76 = vector.extract_strided_slice %72 {offsets = [64, 0], sizes = [64, 128], strides = [1, 1]} : vector<192x128xf32> to vector<64x128xf32>
      %77 = arith.truncf %76 : vector<64x128xf32> to vector<64x128xbf16>
      %c0_37 = arith.constant 0 : index
      %c0_38 = arith.constant 0 : index
      %78 = vector.load %arg10[%c0_37, %c0_38] : memref<64x128xbf16, #tpu.memory_space<vmem>>, vector<64x128xbf16>
      tpu.vector_store %arg10[%c0_37, %c0_38], %77 {strides = array<i32>} : memref<64x128xbf16, #tpu.memory_space<vmem>>, vector<64x128xbf16>,
      %79 = vector.extract_strided_slice %72 {offsets = [128, 0], sizes = [64, 128], strides = [1, 1]} : vector<192x128xf32> to vector<64x128xf32>
      %80 = arith.truncf %79 : vector<64x128xf32> to vector<64x128xbf16>
      %c0_39 = arith.constant 0 : index
      %c0_40 = arith.constant 0 : index
      %81 = vector.load %arg11[%c0_39, %c0_40] : memref<64x128xbf16, #tpu.memory_space<vmem>>, vector<64x128xbf16>
      tpu.vector_store %arg11[%c0_39, %c0_40], %80 {strides = array<i32>} : memref<64x128xbf16, #tpu.memory_space<vmem>>, vector<64x128xbf16>,
    } else {
    }
    %c128_i32 = arith.constant 128 : i32
    %4 = arith.muli %arg1, %c128_i32 : i32
    %5 = tpu.assume_multiple %4, 128 : i32
    %c0_2 = arith.constant 0 : index
    %6 = arith.index_cast %5 : i32 to index
    %7 = vector.load %arg9[%c0_2, %6] : memref<64x128xbf16, #tpu.memory_space<vmem>>, vector<64x128xbf16>
    %c0_3 = arith.constant 0 : index
    %c0_4 = arith.constant 0 : index
    %8 = vector.load %arg10[%c0_3, %c0_4] : memref<64x128xbf16, #tpu.memory_space<vmem>>, vector<64x128xbf16>
    %cst = arith.constant dense<0.000000e+00> : vector<128x128xf32>
    %9 = tpu.matmul %7, %8, %cst {dimension_numbers = #tpu.dot_dimension_numbers<[0], [0], [1], [1], [0, 1, 1, 1], [], []>} : vector<64x128xbf16>, vector<64x128xbf16>, vector<128x128xf32> -> vector<128x128xf32>
    %c0_5 = arith.constant 0 : index
    %c0_6 = arith.constant 0 : index
    %10 = vector.load %arg3[%c0_5, %c0_6] : memref<1x128xf32, #tpu.memory_space<vmem>>, vector<1x128xf32>
    %11 = vector.broadcast %10 : vector<1x128xf32> to vector<128x128xf32>
    %12 = arith.addf %9, %11 : vector<128x128xf32>
    %cst_7 = arith.constant dense<0xFF800000> : vector<128xf32>
    %13 = vector.multi_reduction <maximumf>, %12, %cst_7 [1] : vector<128x128xf32> to vector<128xf32>
    %14 = vector.shape_cast %13 : vector<128xf32> to vector<128x1xf32>
    %15 = vector.broadcast %14 : vector<128x1xf32> to vector<128x128xf32>
    %16 = arith.subf %12, %15 : vector<128x128xf32>
    %17 = math.exp %16 : vector<128x128xf32>
    %18 = arith.truncf %17 : vector<128x128xf32> to vector<128x128xbf16>
    %c0_8 = arith.constant 0 : index
    %c0_9 = arith.constant 0 : index
    %19 = vector.load %arg11[%c0_8, %c0_9] : memref<64x128xbf16, #tpu.memory_space<vmem>>, vector<64x128xbf16>
    %cst_10 = arith.constant dense<0.000000e+00> : vector<64x128xf32>
    %20 = tpu.matmul %19, %18, %cst_10 {dimension_numbers = #tpu.dot_dimension_numbers<[1], [1], [0], [0], [0, 0, 1, 0], [], []>} : vector<64x128xbf16>, vector<128x128xbf16>, vector<64x128xf32> -> vector<64x128xf32>
    %cst_11 = arith.constant 1.000000e+00 : bf16
    %21 = vector.broadcast %cst_11 : bf16 to vector<8x128xbf16>
    %cst_12 = arith.constant dense<0.000000e+00> : vector<8x128xf32>
    %22 = tpu.matmul %21, %18, %cst_12 {dimension_numbers = #tpu.dot_dimension_numbers<[1], [1], [0], [0], [0, 0, 1, 0], [], []>} : vector<8x128xbf16>, vector<128x128xbf16>, vector<8x128xf32> -> vector<8x128xf32>
    %23 = vector.extract_strided_slice %22 {offsets = [0, 0], sizes = [1, 128], strides = [1, 1]} : vector<8x128xf32> to vector<1x128xf32>
    %24 = tpu.reciprocal %23 {approx = true} : vector<1x128xf32> -> vector<1x128xf32>
    %25 = vector.broadcast %24 : vector<1x128xf32> to vector<64x128xf32>
    %26 = arith.mulf %20, %25 : vector<64x128xf32>
    %c0_13 = arith.constant 0 : index
    %c0_14 = arith.constant 0 : index
    %27 = vector.load %arg6[%c0_13, %c0_14] : memref<64x64xbf16, #tpu.memory_space<vmem>>, vector<64x64xbf16>
    %28 = arith.truncf %26 : vector<64x128xf32> to vector<64x128xbf16>
    %cst_15 = arith.constant dense<0.000000e+00> : vector<64x128xf32>
    %29 = tpu.matmul %27, %28, %cst_15 {dimension_numbers = #tpu.dot_dimension_numbers<[1], [0], [0], [1], [0, 0, 1, 1], [], []>} : vector<64x64xbf16>, vector<64x128xbf16>, vector<64x128xf32> -> vector<64x128xf32>
    %30 = vector.extract_strided_slice %0 {offsets = [192, 0], sizes = [64, 1], strides = [1, 1]} : vector<256x1xf32> to vector<64x1xf32>
    %31 = vector.broadcast %30 : vector<64x1xf32> to vector<64x128xf32>
    %32 = arith.addf %29, %31 : vector<64x128xf32>
    %c0_16 = arith.constant 0 : index
    %c0_17 = arith.constant 0 : index
    %33 = arith.index_cast %5 : i32 to index
    %34 = vector.load %arg2[%c0_16, %c0_17, %33] : memref<1x64x128xf32, #tpu.memory_space<vmem>>, vector<1x64x128xf32>
    %35 = vector.shape_cast %34 : vector<1x64x128xf32> to vector<64x128xf32>
    %36 = arith.addf %35, %32 : vector<64x128xf32>
    %c0_18 = arith.constant 0 : index
    %c0_19 = arith.constant 0 : index
    %c0_20 = arith.constant 0 : index
    %37 = vector.load %arg8[%c0_18, %c0_19, %c0_20] : memref<1x64x128xf32, #tpu.memory_space<vmem>>, vector<1x64x128xf32>
    %38 = vector.shape_cast %37 : vector<1x64x128xf32> to vector<64x128xf32>
    %39 = vector.shape_cast %36 : vector<64x128xf32> to vector<1x64x128xf32>
    tpu.vector_store %arg8[%c0_18, %c0_19, %c0_20], %39 {strides = array<i32>} : memref<1x64x128xf32, #tpu.memory_space<vmem>>, vector<1x64x128xf32>,
    return
  }
  func.func @transform_0(%arg0: i32, %arg1: i32) -> (i32, i32, i32) {
    %c0_i32 = arith.constant 0 : i32
    %c0_i32_0 = arith.constant 0 : i32
    %c0_i32_1 = arith.constant 0 : i32
    return %arg0, %c0_i32, %c0_i32_0 : i32, i32, i32
  }
  func.func @transform_1(%arg0: i32, %arg1: i32) -> (i32, i32) {
    %c0_i32 = arith.constant 0 : i32
    %c0_i32_0 = arith.constant 0 : i32
    %c0_i32_1 = arith.constant 0 : i32
    return %c0_i32, %c0_i32_0 : i32, i32
  }
  func.func @transform_2(%arg0: i32, %arg1: i32) -> (i32, i32) {
    %c0_i32 = arith.constant 0 : i32
    %c0_i32_0 = arith.constant 0 : i32
    %c0_i32_1 = arith.constant 0 : i32
    return %c0_i32, %c0_i32_0 : i32, i32
  }
  func.func @transform_3(%arg0: i32, %arg1: i32) -> (i32, i32) {
    %c0_i32 = arith.constant 0 : i32
    %c0_i32_0 = arith.constant 0 : i32
    %c0_i32_1 = arith.constant 0 : i32
    return %c0_i32, %c0_i32_0 : i32, i32
  }
  func.func @transform_4(%arg0: i32, %arg1: i32) -> (i32, i32) {
    %c0_i32 = arith.constant 0 : i32
    %c0_i32_0 = arith.constant 0 : i32
    %c0_i32_1 = arith.constant 0 : i32
    return %c0_i32, %c0_i32_0 : i32, i32
  }
  func.func @transform_5(%arg0: i32, %arg1: i32) -> (i32, i32) {
    %c0_i32 = arith.constant 0 : i32
    %c0_i32_0 = arith.constant 0 : i32
    %c0_i32_1 = arith.constant 0 : i32
    return %c0_i32, %c0_i32_0 : i32, i32
  }
  func.func @transform_6(%arg0: i32, %arg1: i32) -> (i32, i32, i32) {
    %c0_i32 = arith.constant 0 : i32
    %c0_i32_0 = arith.constant 0 : i32
    return %arg0, %c0_i32, %arg1 : i32, i32, i32
  }
}

</mosaic_0001>

<llo_original>
// kernel: attn_block.1
$region0: #{attn_block.1}
  #allocation0 [shape = 'u32[]', space=smem, size = 0x4, offset = 0x4, fixed_abs, tag = 'smem constant byte address 0x4 - core index']
  #allocation1 [shape = 'u32[72,128]{1,0:T(1,128)}', space=vmem, size = 0x9000, scoped, tag = 'internal scratch']
  #allocation2 [shape = 'bf16[64,128]{1,0:T(8,128)(2,1)}', space=vmem, size = 0x4000, scoped, tag = 'scratch operand']
  #allocation3 [shape = 'bf16[64,128]{1,0:T(8,128)(2,1)}', space=vmem, size = 0x4000, scoped, tag = 'scratch operand']
  #allocation4 [shape = 'bf16[64,128]{1,0:T(8,128)(2,1)}', space=vmem, size = 0x4000, scoped, tag = 'scratch operand']
  %s0 = inlined_call_operand.vmem [shape: f32[2,64,128], index: 0, kind: input, shape index: {}, may-alias: {0,6}]
  %s1 = inlined_call_operand.vmem [shape: f32[1,128], index: 1, kind: input, shape index: {}]
  %s2 = inlined_call_operand.vmem [shape: f32[64,32], index: 2, kind: input, shape index: {}]
  %s3 = inlined_call_operand.vmem [shape: bf16[192,64], index: 3, kind: input, shape index: {}]
  %s4 = inlined_call_operand.vmem [shape: bf16[64,64], index: 4, kind: input, shape index: {}]
  %s5 = inlined_call_operand.vmem [shape: f32[256,1], index: 5, kind: input, shape index: {}]
  %s6 = inlined_call_operand.vmem [shape: f32[2,64,128], index: 6, kind: output, shape index: {}, may-alias: {0,6}]
  %s7 = sld [smem:[#allocation0]]
  $region61: #{attn_block.1} parent=0
    _
  %s9 = ssub.s32 1, %s7
  %s10 = scalar_select 0, %s9, %s7
  loop: start=0, step=1, limit=4
  $region2: #{attn_block.1} parent=0 // loop_pre_header
    _
  $region3: #{attn_block.1} parent=0 // loop_header
    %s12 = sphi 0, %s16
    %p13 = scmp.ge.s32.totalorder %s12, 4
    %s19 = sphi 0, %s31
    %s20 = sphi 0, %s27
    %s21 = sphi 0, %s19
    %s22 = sphi 0, %s20
    %s23 = sphi 0, %s21
    %s24 = sphi 0, %s22
    %s34 = sphi 0, %s36
    %s37 = sphi 0, %s34
    %s38 = sphi 0, %s37
    %s54 = sphi 0, %s38
    %s58 = sphi 0, %s58
    %s60 = sphi 0, %s58
    %s61 = sphi 0, %s60
    %s75 = sphi 0, %s61
    %s79 = sphi 0, %s79
    %s81 = sphi 0, %s79
    %s82 = sphi 0, %s81
    %s96 = sphi 0, %s82
    %s100 = sphi 0, %s100
    %s102 = sphi 0, %s100
    %s103 = sphi 0, %s102
    %s117 = sphi 0, %s103
    %s121 = sphi 0, %s121
    %s123 = sphi 0, %s121
    %s124 = sphi 0, %s123
    %s138 = sphi 0, %s124
    %s142 = sphi 0, %s142
    %s144 = sphi 0, %s142
    %s145 = sphi 0, %s144
    %s159 = sphi 0, %s145
    %s167 = sphi 0, %s169
    %s170 = sphi 0, %s167
    %s171 = sphi 0, %s170
    %s187 = sphi 0, %s171
  $region4: #{attn_block.1} parent=0 // loop_header_branch
    %15 = sbr.rel (%p13) target = $region8
  $region5: #{attn_block.1} parent=0 // loop_body
    %s17 = ssub.s32 %s12, 1
    %s18 = ssub.s32 %s12, 2
    %s25 = sadd.s32 1, %s20
    %p26 = scmp.ge.s32.totalorder %s25, 1
    %s27 = scalar_select %p26, 0, %s25
    %s28 = sadd.s32 1, %s19
    %s29 = scalar_select %p26, %s28, %s19
    %p30 = scmp.ge.s32.totalorder %s29, 2
    %s31 = scalar_select %p30, 0, %s29
    %s32 = ssub.s32 %s19, %s31
    %p33 = scmp.eq.s32.totalorder %s32, 0
    %s35 = sadd.s32 %s34, 1
    %s36 = scalar_select %p33, %s34, %s35
    %p39 = pneg %p33
    %p40 = scmp.eq.s32.totalorder %s12, 1
    %p41 = por %p39, %p40
    %p42 = scmp.ne.s32.totalorder %s34, %s37
    %p43 = scmp.eq.s32.totalorder %s12, 0
    %p44 = por %p42, %p43
    %p45 = scmp.ne.s32.totalorder %s34, %s37
    %p46 = scmp.eq.s32.totalorder %s17, 1
    %p47 = por %p45, %p46
    %p48 = scmp.ne.s32.totalorder %s37, %s38
    %p49 = scmp.eq.s32.totalorder %s17, 0
    %p50 = por %p48, %p49
    %p51 = scmp.ne.s32.totalorder %s37, %s38
    %p52 = scmp.eq.s32.totalorder %s18, 1
    %p53 = por %p51, %p52
    %p55 = scmp.ne.s32.totalorder %s38, %s54
    %p56 = scmp.eq.s32.totalorder %s18, 0
    %p57 = por %p55, %p56
    %s59 = sadd.s32 %s58, 1
    %p62 = scmp.eq.s32.totalorder %s12, 1
    %p63 = scmp.ne.s32.totalorder %s58, %s60
    %p64 = scmp.eq.s32.totalorder %s12, 0
    %p65 = por %p63, %p64
    %p66 = scmp.ne.s32.totalorder %s58, %s60
    %p67 = scmp.eq.s32.totalorder %s17, 1
    %p68 = por %p66, %p67
    %p69 = scmp.ne.s32.totalorder %s60, %s61
    %p70 = scmp.eq.s32.totalorder %s17, 0
    %p71 = por %p69, %p70
    %p72 = scmp.ne.s32.totalorder %s60, %s61
    %p73 = scmp.eq.s32.totalorder %s18, 1
    %p74 = por %p72, %p73
    %p76 = scmp.ne.s32.totalorder %s61, %s75
    %p77 = scmp.eq.s32.totalorder %s18, 0
    %p78 = por %p76, %p77
    %s80 = sadd.s32 %s79, 1
    %p83 = scmp.eq.s32.totalorder %s12, 1
    %p84 = scmp.ne.s32.totalorder %s79, %s81
    %p85 = scmp.eq.s32.totalorder %s12, 0
    %p86 = por %p84, %p85
    %p87 = scmp.ne.s32.totalorder %s79, %s81
    %p88 = scmp.eq.s32.totalorder %s17, 1
    %p89 = por %p87, %p88
    %p90 = scmp.ne.s32.totalorder %s81, %s82
    %p91 = scmp.eq.s32.totalorder %s17, 0
    %p92 = por %p90, %p91
    %p93 = scmp.ne.s32.totalorder %s81, %s82
    %p94 = scmp.eq.s32.totalorder %s18, 1
    %p95 = por %p93, %p94
    %p97 = scmp.ne.s32.totalorder %s82, %s96
    %p98 = scmp.eq.s32.totalorder %s18, 0
    %p99 = por %p97, %p98
    %s101 = sadd.s32 %s100, 1
    %p104 = scmp.eq.s32.totalorder %s12, 1
    %p105 = scmp.ne.s32.totalorder %s100, %s102
    %p106 = scmp.eq.s32.totalorder %s12, 0
    %p107 = por %p105, %p106
    %p108 = scmp.ne.s32.totalorder %s100, %s102
    %p109 = scmp.eq.s32.totalorder %s17, 1
    %p110 = por %p108, %p109
    %p111 = scmp.ne.s32.totalorder %s102, %s103
    %p112 = scmp.eq.s32.totalorder %s17, 0
    %p113 = por %p111, %p112
    %p114 = scmp.ne.s32.totalorder %s102, %s103
    %p115 = scmp.eq.s32.totalorder %s18, 1
    %p116 = por %p114, %p115
    %p118 = scmp.ne.s32.totalorder %s103, %s117
    %p119 = scmp.eq.s32.totalorder %s18, 0
    %p120 = por %p118, %p119
    %s122 = sadd.s32 %s121, 1
    %p125 = scmp.eq.s32.totalorder %s12, 1
    %p126 = scmp.ne.s32.totalorder %s121, %s123
    %p127 = scmp.eq.s32.totalorder %s12, 0
    %p128 = por %p126, %p127
    %p129 = scmp.ne.s32.totalorder %s121, %s123
    %p130 = scmp.eq.s32.totalorder %s17, 1
    %p131 = por %p129, %p130
    %p132 = scmp.ne.s32.totalorder %s123, %s124
    %p133 = scmp.eq.s32.totalorder %s17, 0
    %p134 = por %p132, %p133
    %p135 = scmp.ne.s32.totalorder %s123, %s124
    %p136 = scmp.eq.s32.totalorder %s18, 1
    %p137 = por %p135, %p136
    %p139 = scmp.ne.s32.totalorder %s124, %s138
    %p140 = scmp.eq.s32.totalorder %s18, 0
    %p141 = por %p139, %p140
    %s143 = sadd.s32 %s142, 1
    %p146 = scmp.eq.s32.totalorder %s12, 1
    %p147 = scmp.ne.s32.totalorder %s142, %s144
    %p148 = scmp.eq.s32.totalorder %s12, 0
    %p149 = por %p147, %p148
    %p150 = scmp.ne.s32.totalorder %s142, %s144
    %p151 = scmp.eq.s32.totalorder %s17, 1
    %p152 = por %p150, %p151
    %p153 = scmp.ne.s32.totalorder %s144, %s145
    %p154 = scmp.eq.s32.totalorder %s17, 0
    %p155 = por %p153, %p154
    %p156 = scmp.ne.s32.totalorder %s144, %s145
    %p157 = scmp.eq.s32.totalorder %s18, 1
    %p158 = por %p156, %p157
    %p160 = scmp.ne.s32.totalorder %s145, %s159
    %p161 = scmp.eq.s32.totalorder %s18, 0
    %p162 = por %p160, %p161
    %s163 = ssub.s32 %s19, %s31
    %s164 = ssub.s32 %s20, %s27
    %s165 = sor.u32 %s163, %s164
    %p166 = scmp.eq.s32.totalorder %s165, 0
    %s168 = sadd.s32 %s167, 1
    %s169 = scalar_select %p166, %s167, %s168
    %p172 = pneg %p166
    %p173 = scmp.eq.s32.totalorder %s12, 1
    %p174 = por %p172, %p173
    %p175 = scmp.ne.s32.totalorder %s167, %s170
    %p176 = scmp.eq.s32.totalorder %s12, 0
    %p177 = por %p175, %p176
    %p178 = scmp.ne.s32.totalorder %s167, %s170
    %p179 = scmp.eq.s32.totalorder %s17, 1
    %p180 = por %p178, %p179
    %p181 = scmp.ne.s32.totalorder %s170, %s171
    %p182 = scmp.eq.s32.totalorder %s17, 0
    %p183 = por %p181, %p182
    %p184 = scmp.ne.s32.totalorder %s170, %s171
    %p185 = scmp.eq.s32.totalorder %s18, 1
    %p186 = por %p184, %p185
    %p188 = scmp.ne.s32.totalorder %s171, %s187
    %p189 = scmp.eq.s32.totalorder %s18, 0
    %p190 = por %p188, %p189
    %p191 = scmp.le.s32.totalorder 1, %s12
    %p192 = scmp.lt.s32.totalorder %s12, 3
    %p193 = pnand %p191, %p192
    %p194 = pneg %p193
    // Predicated region
    $region9: #{attn_block.1} parent=5 // pred_check
      _
    $region10: #{attn_block.1} parent=5 // pred_check_branch
      %196 = sbr.rel (%p193) target = $region12
    $region11: #{attn_block.1} parent=5 // pred_region
      %s197 = ssub.s32 %s12, 1
      // Predicated region
      $region13: #{attn_block.1} parent=11 // pred_check
        %p198 = pneg %p71
      $region14: #{attn_block.1} parent=11 // pred_check_branch
        %200 = sbr.rel (%p198) target = $region16
      $region15: #{attn_block.1} parent=11 // pred_region
        _
      $region16: #{attn_block.1} parent=11 // pred_fallthru
        _
      // Predicated region
      $region17: #{attn_block.1} parent=11 // pred_check
        %p201 = pneg %p92
      $region18: #{attn_block.1} parent=11 // pred_check_branch
        %203 = sbr.rel (%p201) target = $region20
      $region19: #{attn_block.1} parent=11 // pred_region
        _
      $region20: #{attn_block.1} parent=11 // pred_fallthru
        _
      // Predicated region
      $region21: #{attn_block.1} parent=11 // pred_check
        %p204 = pneg %p113
      $region22: #{attn_block.1} parent=11 // pred_check_branch
        %206 = sbr.rel (%p204) target = $region24
      $region23: #{attn_block.1} parent=11 // pred_region
        _
      $region24: #{attn_block.1} parent=11 // pred_fallthru
        _
      // Predicated region
      $region25: #{attn_block.1} parent=11 // pred_check
        %p207 = pneg %p134
      $region26: #{attn_block.1} parent=11 // pred_check_branch
        %209 = sbr.rel (%p207) target = $region28
      $region27: #{attn_block.1} parent=11 // pred_region
        _
      $region28: #{attn_block.1} parent=11 // pred_fallthru
        _
      // Predicated region
      $region29: #{attn_block.1} parent=11 // pred_check
        %p210 = pneg %p155
      $region30: #{attn_block.1} parent=11 // pred_check_branch
        %212 = sbr.rel (%p210) target = $region32
      $region31: #{attn_block.1} parent=11 // pred_region
        _
      $region32: #{attn_block.1} parent=11 // pred_fallthru
        _
    $region12: #{attn_block.1} parent=5 // pred_fallthru
      _
    %p213 = scmp.lt.s32.totalorder %s12, 2
    // Predicated region
    $region33: #{attn_block.1} parent=5 // pred_check
      %p214 = pneg %p213
    $region34: #{attn_block.1} parent=5 // pred_check_branch
      %216 = sbr.rel (%p214) target = $region36
    $region35: #{attn_block.1} parent=5 // pred_region
      // Predicated region
      $region37: #{attn_block.1} parent=35 // pred_check
        %p217 = pneg %p44
      $region38: #{attn_block.1} parent=35 // pred_check_branch
        %219 = sbr.rel (%p217) target = $region40
      $region39: #{attn_block.1} parent=35 // pred_region
        %p220 = scmp.lt.s32.totalorder %s19, 1
        %s221 = scalar_select %p220, %s19, 1
        %s222 = smul.addr %s221, 8
        %s223 = smul.addr %s222, 8
        %s224 = scalar_lea.vmem %s0, %s223
      $region40: #{attn_block.1} parent=35 // pred_fallthru
        _
    $region36: #{attn_block.1} parent=5 // pred_fallthru
      _
    %p225 = scmp.le.s32.totalorder 1, %s12
    %p226 = scmp.lt.s32.totalorder %s12, 3
    %p227 = pnand %p225, %p226
    %p228 = pneg %p227
    // Predicated region
    $region41: #{attn_block.1} parent=5 // pred_check
      _
    $region42: #{attn_block.1} parent=5 // pred_check_branch
      %230 = sbr.rel (%p227) target = $region44
    $region43: #{attn_block.1} parent=5 // pred_region
      %s231 = ssub.s32 %s12, 1
      %p232 = scmp.lt.s32.totalorder %s21, 1
      %s233 = scalar_select %p232, %s21, 1
      %s234 = smul.addr %s233, 8
      %s235 = smul.addr %s234, 8
      %s236 = scalar_lea.vmem %s0, %s235
      %p237 = pneg %p50
      %p238 = pneg %p47
      %p239 = pneg %p71
      %p240 = pneg %p68
      %p241 = pneg %p92
      %p242 = pneg %p89
      %p243 = pneg %p113
      %p244 = pneg %p110
      %p245 = pneg %p134
      %p246 = pneg %p131
      %p247 = pneg %p155
      %p248 = pneg %p152
      %p249 = pneg %p183
      %p250 = pneg %p180
      %p251 = scmp.lt.s32.totalorder %s21, 1
      %s252 = scalar_select %p251, %s21, 1
      %p253 = scmp.lt.s32.totalorder %s22, 0
      %s254 = scalar_select %p253, %s22, 0
      %s255 = smul.addr %s252, 8
      %s256 = sadd.s32 %s254, %s255
      %s257 = smul.addr %s256, 8
      %s258 = scalar_lea.vmem %s6, %s257
      %p259 = scmp.lt.s32.totalorder %s21, 1
      %s260 = scalar_select %p259, %s21, 1
      %s261 = smul.addr %s260, 8
      %s262 = smul.addr %s261, 8
      %s263 = scalar_lea.vmem %s0, %s262
      %p264 = scmp.lt.s32.totalorder %s21, 1
      %s265 = scalar_select %p264, %s21, 1
      %p266 = scmp.lt.s32.totalorder %s22, 0
      %s267 = scalar_select %p266, %s22, 0
      %s268 = smul.addr %s265, 8
      %s269 = sadd.s32 %s267, %s268
      %s270 = smul.addr %s269, 8
      %s271 = scalar_lea.vmem %s6, %s270
      %v274 = vld [vmem:[%s5] sm:$0xff]
      %v275 = vld [vmem:[%s5 + $0x8] sm:$0xff]
      %v276 = vld [vmem:[%s5 + $0x10] sm:$0xff]
      %v277 = vld [vmem:[%s5 + $0x18] sm:$0xff]
      %v278 = vld [vmem:[%s5 + $0x20] sm:$0xff]
      %v279 = vld [vmem:[%s5 + $0x28] sm:$0xff]
      %v280 = vld [vmem:[%s5 + $0x30] sm:$0xff]
      %v281 = vld [vmem:[%s5 + $0x38] sm:$0xff]
      %v282 = vld [vmem:[%s5 + $0x40] sm:$0xff]
      %v283 = vld [vmem:[%s5 + $0x48] sm:$0xff]
      %v284 = vld [vmem:[%s5 + $0x50] sm:$0xff]
      %v285 = vld [vmem:[%s5 + $0x58] sm:$0xff]
      %v286 = vld [vmem:[%s5 + $0x60] sm:$0xff]
      %v287 = vld [vmem:[%s5 + $0x68] sm:$0xff]
      %v288 = vld [vmem:[%s5 + $0x70] sm:$0xff]
      %v289 = vld [vmem:[%s5 + $0x78] sm:$0xff]
      %v290 = vld [vmem:[%s5 + $0x80] sm:$0xff]
      %v291 = vld [vmem:[%s5 + $0x88] sm:$0xff]
      %v292 = vld [vmem:[%s5 + $0x90] sm:$0xff]
      %v293 = vld [vmem:[%s5 + $0x98] sm:$0xff]
      %v294 = vld [vmem:[%s5 + $0xa0] sm:$0xff]
      %v295 = vld [vmem:[%s5 + $0xa8] sm:$0xff]
      %v296 = vld [vmem:[%s5 + $0xb0] sm:$0xff]
      %v297 = vld [vmem:[%s5 + $0xb8] sm:$0xff]
      %v298 = vld [vmem:[%s5 + $0xc0] sm:$0xff]
      %v299 = vld [vmem:[%s5 + $0xc8] sm:$0xff]
      %v300 = vld [vmem:[%s5 + $0xd0] sm:$0xff]
      %v301 = vld [vmem:[%s5 + $0xd8] sm:$0xff]
      %v302 = vld [vmem:[%s5 + $0xe0] sm:$0xff]
      %v303 = vld [vmem:[%s5 + $0xe8] sm:$0xff]
      %v304 = vld [vmem:[%s5 + $0xf0] sm:$0xff]
      %v305 = vld [vmem:[%s5 + $0xf8] sm:$0xff]
      %p306 = scmp.eq.s32.totalorder %s22, 0
      // Predicated region
      $region45: #{attn_block.1} parent=43 // pred_check
        %p307 = pneg %p306
      $region46: #{attn_block.1} parent=43 // pred_check_branch
        %309 = sbr.rel (%p307) target = $region48
      $region47: #{attn_block.1} parent=43 // pred_region
        %v310 = vld [vmem:[%s263] sm:$0xff]
        %v311 = vld [vmem:[%s263 + $0x8] sm:$0xff]
        %v312 = vld [vmem:[%s263 + $0x10] sm:$0xff]
        %v313 = vld [vmem:[%s263 + $0x18] sm:$0xff]
        %v314 = vld [vmem:[%s263 + $0x20] sm:$0xff]
        %v315 = vld [vmem:[%s263 + $0x28] sm:$0xff]
        %v316 = vld [vmem:[%s263 + $0x30] sm:$0xff]
        %v317 = vld [vmem:[%s263 + $0x38] sm:$0xff]
        %v318 = vld [vmem:[%s2] sm:$0xff]
        %v319 = vld [vmem:[%s2 + $0x8] sm:$0xff]
        %v320 = vld [vmem:[%s2 + $0x10] sm:$0xff]
        %v321 = vld [vmem:[%s2 + $0x18] sm:$0xff]
        %v322 = vld [vmem:[%s2 + $0x20] sm:$0xff]
        %v323 = vld [vmem:[%s2 + $0x28] sm:$0xff]
        %v324 = vld [vmem:[%s2 + $0x30] sm:$0xff]
        %v325 = vld [vmem:[%s2 + $0x38] sm:$0xff]
        %326 = vadd.xlane.f32.xlu0 %v310
        %v327 = vpop.xlane.xlu0 %326
        %328 = vadd.xlane.f32.xlu0 %v311
        %v329 = vpop.xlane.xlu0 %328
        %330 = vadd.xlane.f32.xlu0 %v312
        %v331 = vpop.xlane.xlu0 %330
        %332 = vadd.xlane.f32.xlu0 %v313
        %v333 = vpop.xlane.xlu0 %332
        %334 = vadd.xlane.f32.xlu0 %v314
        %v335 = vpop.xlane.xlu0 %334
        %336 = vadd.xlane.f32.xlu0 %v315
        %v337 = vpop.xlane.xlu0 %336
        %338 = vadd.xlane.f32.xlu0 %v316
        %v339 = vpop.xlane.xlu0 %338
        %340 = vadd.xlane.f32.xlu0 %v317
        %v341 = vpop.xlane.xlu0 %340
        %v342 = vmul.f32 %v310, %v310
        %v343 = vmul.f32 %v311, %v311
        %v344 = vmul.f32 %v312, %v312
        %v345 = vmul.f32 %v313, %v313
        %v346 = vmul.f32 %v314, %v314
        %v347 = vmul.f32 %v315, %v315
        %v348 = vmul.f32 %v316, %v316
        %v349 = vmul.f32 %v317, %v317
        %350 = vadd.xlane.f32.xlu0 %v342
        %v351 = vpop.xlane.xlu0 %350
        %352 = vadd.xlane.f32.xlu0 %v343
        %v353 = vpop.xlane.xlu0 %352
        %354 = vadd.xlane.f32.xlu0 %v344
        %v355 = vpop.xlane.xlu0 %354
        %356 = vadd.xlane.f32.xlu0 %v345
        %v357 = vpop.xlane.xlu0 %356
        %358 = vadd.xlane.f32.xlu0 %v346
        %v359 = vpop.xlane.xlu0 %358
        %360 = vadd.xlane.f32.xlu0 %v347
        %v361 = vpop.xlane.xlu0 %360
        %362 = vadd.xlane.f32.xlu0 %v348
        %v363 = vpop.xlane.xlu0 %362
        %364 = vadd.xlane.f32.xlu0 %v349
        %v365 = vpop.xlane.xlu0 %364
        %vm366 = vcmask 7168
        %v367 = vsel %vm366, %v327, %v351
        %v368 = vsel %vm366, %v329, %v353
        %v369 = vsel %vm366, %v331, %v355
        %v370 = vsel %vm366, %v333, %v357
        %v371 = vsel %vm366, %v335, %v359
        %v372 = vsel %vm366, %v337, %v361
        %v373 = vsel %vm366, %v339, %v363
        %v374 = vsel %vm366, %v341, %v365
        %375 = vxpose.xlu0.b32.start [1/16] %v318, 128
        %376 = vxpose.xlu0.b32.cont [2/16] %v319, 128
        %377 = vxpose.xlu0.b32.cont [3/16] %v320, 128
        %378 = vxpose.xlu0.b32.cont [4/16] %v321, 128
        %379 = vxpose.xlu0.b32.cont [5/16] %v322, 128
        %380 = vxpose.xlu0.b32.cont [6/16] %v323, 128
        %381 = vxpose.xlu0.b32.cont [7/16] %v324, 128
        %382 = vxpose.xlu0.b32.cont [8/16] %v325, 128
        %383 = vxpose.xlu0.b32.cont [9/16] 0.0, 128
        %384 = vxpose.xlu0.b32.cont [10/16] 0.0, 128
        %385 = vxpose.xlu0.b32.cont [11/16] 0.0, 128
        %386 = vxpose.xlu0.b32.cont [12/16] 0.0, 128
        %387 = vxpose.xlu0.b32.cont [13/16] 0.0, 128
        %388 = vxpose.xlu0.b32.cont [14/16] 0.0, 128
        %389 = vxpose.xlu0.b32.cont [15/16] 0.0, 128
        %390 = vxpose.xlu0.b32.end [16/16] 0.0, 128
        %v391 = vpop.trf.xlu0
        %v392 = vpop.trf.xlu0
        %v393 = vpop.trf.xlu0
        %v394 = vpop.trf.xlu0
        %v395 = vpop.trf.xlu0
        %v396 = vpop.trf.xlu0
        %v397 = vpop.trf.xlu0
        %v398 = vpop.trf.xlu0
        %v399 = vpop.trf.xlu0
        %v400 = vpop.trf.xlu0
        %v401 = vpop.trf.xlu0
        %v402 = vpop.trf.xlu0
        %v403 = vpop.trf.xlu0
        %v404 = vpop.trf.xlu0
        %v405 = vpop.trf.xlu0
        %v406 = vpop.trf.xlu0
        %vm407 = vcmask 523264
        %v409 = vsel %vm407, %v391, 0
        %v412 = vsel %vm407, %v392, 0
        %v415 = vsel %vm407, %v393, 0
        %v418 = vsel %vm407, %v394, 0
        %420 = vmatpush.msra.mxu0 0.0
        %421 = vmatpush.msra.mxu0 0.0
        %422 = vmatpush.msra.mxu0 0.0
        %423 = vmatpush.msra.mxu0 0.0
        %424 = vmatpush.msra.mxu0 0.0
        %425 = vmatpush.msra.mxu0 0.0
        %426 = vmatpush.msra.mxu0 0.0
        %427 = vmatpush.msra.mxu0 0.0
        %428 = vmatpush.msra.mxu0 %v374
        %429 = vmatpush.msra.mxu0 %v373
        %430 = vmatpush.msra.mxu0 %v372
        %431 = vmatpush.msra.mxu0 %v371
        %432 = vmatpush.msra.mxu0 %v370
        %433 = vmatpush.msra.mxu0 %v369
        %434 = vmatpush.msra.mxu0 %v368
        %435 = vmatpush.msra.mxu0 %v367
        %436 = vmatmul.f32.gmra.mxu0 %v409
        %v437 = vpop.f32.mrf.mxu0
        %v438 = vadd.f32 0.0, %v437
        %439 = vmatmul.f32.gmra.mxu0 %v412
        %v440 = vpop.f32.mrf.mxu0
        %v441 = vadd.f32 0.0, %v440
        %442 = vmatmul.f32.gmra.mxu0 %v415
        %v443 = vpop.f32.mrf.mxu0
        %v444 = vadd.f32 0.0, %v443
        %445 = vmatmul.f32.gmra.mxu0 %v418
        %v446 = vpop.f32.mrf.mxu0
        %v447 = vadd.f32 0.0, %v446
        %448 = vdwg.mxu0
        %v449 = vmul.f32 %v438, 0.03125
        %v450 = vmul.f32 %v441, 0.03125
        %v451 = vmul.f32 %v444, 0.03125
        %v452 = vmul.f32 %v447, 0.03125
        %v453 = vmul.f32 %v449, %v449
        %v454 = vmul.f32 %v450, %v450
        %v455 = vmul.f32 %v451, %v451
        %v456 = vmul.f32 %v452, %v452
        %461 = vrot.lane.b32.xlu0 %v453, 1
        %v462 = vpop.permute.xlu0 %461
        %463 = vrot.lane.b32.xlu0 %v454, 1
        %v464 = vpop.permute.xlu0 %463
        %465 = vrot.lane.b32.xlu0 %v455, 1
        %v466 = vpop.permute.xlu0 %465
        %467 = vrot.lane.b32.xlu0 %v456, 1
        %v468 = vpop.permute.xlu0 %467
        %v473 = vsub.f32 %v449, %v462
        %v474 = vsub.f32 %v450, %v464
        %v475 = vsub.f32 %v451, %v466
        %v476 = vsub.f32 %v452, %v468
        %v477 = vadd.f32 %v473, 1e-06
        %v478 = vadd.f32 %v474, 1e-06
        %v479 = vadd.f32 %v475, 1e-06
        %v480 = vadd.f32 %v476, 1e-06
        %v481 = vrsqrt.pop %v477
        %v482 = vmul.f32 %v481, %v477
        %v483 = vmul.f32 %v482, %v481
        %v484 = vmul.f32 0.5, %v483
        %v485 = vsub.f32 1.5, %v484
        %v486 = vmul.f32 %v481, %v485
        %vm487 = vweird.f32 %v477
        %vm488 = vweird.f32 %v481
        %vm489 = vmor %vm487, %vm488
        %v490 = vsel %vm489, %v481, %v486
        %v491 = vrsqrt.pop %v478
        %v492 = vmul.f32 %v491, %v478
        %v493 = vmul.f32 %v492, %v491
        %v494 = vmul.f32 0.5, %v493
        %v495 = vsub.f32 1.5, %v494
        %v496 = vmul.f32 %v491, %v495
        %vm497 = vweird.f32 %v478
        %vm498 = vweird.f32 %v491
        %vm499 = vmor %vm497, %vm498
        %v500 = vsel %vm499, %v491, %v496
        %v501 = vrsqrt.pop %v479
        %v502 = vmul.f32 %v501, %v479
        %v503 = vmul.f32 %v502, %v501
        %v504 = vmul.f32 0.5, %v503
        %v505 = vsub.f32 1.5, %v504
        %v506 = vmul.f32 %v501, %v505
        %vm507 = vweird.f32 %v479
        %vm508 = vweird.f32 %v501
        %vm509 = vmor %vm507, %vm508
        %v510 = vsel %vm509, %v501, %v506
        %v511 = vrsqrt.pop %v480
        %v512 = vmul.f32 %v511, %v480
        %v513 = vmul.f32 %v512, %v511
        %v514 = vmul.f32 0.5, %v513
        %v515 = vsub.f32 1.5, %v514
        %v516 = vmul.f32 %v511, %v515
        %vm517 = vweird.f32 %v480
        %vm518 = vweird.f32 %v511
        %vm519 = vmor %vm517, %vm518
        %v520 = vsel %vm519, %v511, %v516
        %v521 = vsel %vm366, %v449, %v490
        %v522 = vsel %vm366, %v450, %v500
        %v523 = vsel %vm366, %v451, %v510
        %v524 = vsel %vm366, %v452, %v520
        %vm525 = vcmask 261120
        %v527 = vsel %vm525, %v318, 0
        %v530 = vsel %vm525, %v319, 0
        %v533 = vsel %vm525, %v320, 0
        %v536 = vsel %vm525, %v321, 0
        %v539 = vsel %vm525, %v322, 0
        %v542 = vsel %vm525, %v323, 0
        %v545 = vsel %vm525, %v324, 0
        %v548 = vsel %vm525, %v325, 0
        %550 = vmatpush.msra.mxu0 0.0
        %551 = vmatpush.msra.mxu0 0.0
        %552 = vmatpush.msra.mxu0 0.0
        %553 = vmatpush.msra.mxu0 0.0
        %554 = vmatpush.msra.mxu0 0.0
        %555 = vmatpush.msra.mxu0 0.0
        %556 = vmatpush.msra.mxu0 0.0
        %557 = vmatpush.msra.mxu0 0.0
        %558 = vmatpush.msra.mxu0 0.0
        %559 = vmatpush.msra.mxu0 0.0
        %560 = vmatpush.msra.mxu0 0.0
        %561 = vmatpush.msra.mxu0 0.0
        %562 = vmatpush.msra.mxu0 %v524
        %563 = vmatpush.msra.mxu0 %v523
        %564 = vmatpush.msra.mxu0 %v522
        %565 = vmatpush.msra.mxu0 %v521
        %566 = vmatmul.f32.gmra.mxu0 %v527
        %v567 = vpop.f32.mrf.mxu0
        %v568 = vadd.f32 0.0, %v567
        %569 = vmatmul.f32.gmra.mxu0 %v530
        %v570 = vpop.f32.mrf.mxu0
        %v571 = vadd.f32 0.0, %v570
        %572 = vmatmul.f32.gmra.mxu0 %v533
        %v573 = vpop.f32.mrf.mxu0
        %v574 = vadd.f32 0.0, %v573
        %575 = vmatmul.f32.gmra.mxu0 %v536
        %v576 = vpop.f32.mrf.mxu0
        %v577 = vadd.f32 0.0, %v576
        %578 = vmatmul.f32.gmra.mxu0 %v539
        %v579 = vpop.f32.mrf.mxu0
        %v580 = vadd.f32 0.0, %v579
        %581 = vmatmul.f32.gmra.mxu0 %v542
        %v582 = vpop.f32.mrf.mxu0
        %v583 = vadd.f32 0.0, %v582
        %584 = vmatmul.f32.gmra.mxu0 %v545
        %v585 = vpop.f32.mrf.mxu0
        %v586 = vadd.f32 0.0, %v585
        %587 = vmatmul.f32.gmra.mxu0 %v548
        %v588 = vpop.f32.mrf.mxu0
        %v589 = vadd.f32 0.0, %v588
        %590 = vdwg.mxu0
        %592 = vset.pattern.permute.xlu0 0
        %593 = vperm.xlu0 %592, %v568
        %v594 = vpop.permute.xlu0 %593
        %597 = vset.pattern.permute.xlu0 0
        %598 = vperm.xlu0 %597, %v571
        %v599 = vpop.permute.xlu0 %598
        %602 = vset.pattern.permute.xlu0 0
        %603 = vperm.xlu0 %602, %v574
        %v604 = vpop.permute.xlu0 %603
        %607 = vset.pattern.permute.xlu0 0
        %608 = vperm.xlu0 %607, %v577
        %v609 = vpop.permute.xlu0 %608
        %612 = vset.pattern.permute.xlu0 0
        %613 = vperm.xlu0 %612, %v580
        %v614 = vpop.permute.xlu0 %613
        %617 = vset.pattern.permute.xlu0 0
        %618 = vperm.xlu0 %617, %v583
        %v619 = vpop.permute.xlu0 %618
        %622 = vset.pattern.permute.xlu0 0
        %623 = vperm.xlu0 %622, %v586
        %v624 = vpop.permute.xlu0 %623
        %627 = vset.pattern.permute.xlu0 0
        %628 = vperm.xlu0 %627, %v589
        %v629 = vpop.permute.xlu0 %628
        %v631 = vsub.f32 %v310, %v594
        %v632 = vsub.f32 %v311, %v599
        %v633 = vsub.f32 %v312, %v604
        %v634 = vsub.f32 %v313, %v609
        %v635 = vsub.f32 %v314, %v614
        %v636 = vsub.f32 %v315, %v619
        %v637 = vsub.f32 %v316, %v624
        %v638 = vsub.f32 %v317, %v629
        %639 = vset.pattern.permute.xlu0 1
        %640 = vperm.xlu0 %639, %v568
        %v641 = vpop.permute.xlu0 %640
        %643 = vset.pattern.permute.xlu0 1
        %644 = vperm.xlu0 %643, %v571
        %v645 = vpop.permute.xlu0 %644
        %647 = vset.pattern.permute.xlu0 1
        %648 = vperm.xlu0 %647, %v574
        %v649 = vpop.permute.xlu0 %648
        %651 = vset.pattern.permute.xlu0 1
        %652 = vperm.xlu0 %651, %v577
        %v653 = vpop.permute.xlu0 %652
        %655 = vset.pattern.permute.xlu0 1
        %656 = vperm.xlu0 %655, %v580
        %v657 = vpop.permute.xlu0 %656
        %659 = vset.pattern.permute.xlu0 1
        %660 = vperm.xlu0 %659, %v583
        %v661 = vpop.permute.xlu0 %660
        %663 = vset.pattern.permute.xlu0 1
        %664 = vperm.xlu0 %663, %v586
        %v665 = vpop.permute.xlu0 %664
        %667 = vset.pattern.permute.xlu0 1
        %668 = vperm.xlu0 %667, %v589
        %v669 = vpop.permute.xlu0 %668
        %v671 = vmul.f32 %v631, %v641
        %v672 = vmul.f32 %v632, %v645
        %v673 = vmul.f32 %v633, %v649
        %v674 = vmul.f32 %v634, %v653
        %v675 = vmul.f32 %v635, %v657
        %v676 = vmul.f32 %v636, %v661
        %v677 = vmul.f32 %v637, %v665
        %v678 = vmul.f32 %v638, %v669
        %v679 = vld [vmem:[%s3] sm:$0xf]
        %v680 = vld [vmem:[%s3 + $0x4] sm:$0xf]
        %v681 = vld [vmem:[%s3 + $0x8] sm:$0xf]
        %v682 = vld [vmem:[%s3 + $0xc] sm:$0xf]
        %v683 = vld [vmem:[%s3 + $0x10] sm:$0xf]
        %v684 = vld [vmem:[%s3 + $0x14] sm:$0xf]
        %v685 = vld [vmem:[%s3 + $0x18] sm:$0xf]
        %v686 = vld [vmem:[%s3 + $0x1c] sm:$0xf]
        %v687 = vld [vmem:[%s3 + $0x20] sm:$0xf]
        %v688 = vld [vmem:[%s3 + $0x24] sm:$0xf]
        %v689 = vld [vmem:[%s3 + $0x28] sm:$0xf]
        %v690 = vld [vmem:[%s3 + $0x2c] sm:$0xf]
        %v691 = vld [vmem:[%s3 + $0x30] sm:$0xf]
        %v692 = vld [vmem:[%s3 + $0x34] sm:$0xf]
        %v693 = vld [vmem:[%s3 + $0x38] sm:$0xf]
        %v694 = vld [vmem:[%s3 + $0x3c] sm:$0xf]
        %v695 = vld [vmem:[%s3 + $0x40] sm:$0xf]
        %v696 = vld [vmem:[%s3 + $0x44] sm:$0xf]
        %v697 = vld [vmem:[%s3 + $0x48] sm:$0xf]
        %v698 = vld [vmem:[%s3 + $0x4c] sm:$0xf]
        %v699 = vld [vmem:[%s3 + $0x50] sm:$0xf]
        %v700 = vld [vmem:[%s3 + $0x54] sm:$0xf]
        %v701 = vld [vmem:[%s3 + $0x58] sm:$0xf]
        %v702 = vld [vmem:[%s3 + $0x5c] sm:$0xf]
        %v703 = vpack.c.bf16 %v672, %v671
        %v704 = vpack.c.bf16 %v674, %v673
        %v705 = vpack.c.bf16 %v676, %v675
        %v706 = vpack.c.bf16 %v678, %v677
        %708 = vset.pattern.permute.xlu0 0
        %709 = vperm.xlu0 %708, %v274
        %v710 = vpop.permute.xlu0 %709
        %713 = vset.pattern.permute.xlu0 0
        %714 = vperm.xlu0 %713, %v275
        %v715 = vpop.permute.xlu0 %714
        %718 = vset.pattern.permute.xlu0 0
        %719 = vperm.xlu0 %718, %v276
        %v720 = vpop.permute.xlu0 %719
        %723 = vset.pattern.permute.xlu0 0
        %724 = vperm.xlu0 %723, %v277
        %v725 = vpop.permute.xlu0 %724
        %728 = vset.pattern.permute.xlu0 0
        %729 = vperm.xlu0 %728, %v278
        %v730 = vpop.permute.xlu0 %729
        %733 = vset.pattern.permute.xlu0 0
        %734 = vperm.xlu0 %733, %v279
        %v735 = vpop.permute.xlu0 %734
        %738 = vset.pattern.permute.xlu0 0
        %739 = vperm.xlu0 %738, %v280
        %v740 = vpop.permute.xlu0 %739
        %743 = vset.pattern.permute.xlu0 0
        %744 = vperm.xlu0 %743, %v281
        %v745 = vpop.permute.xlu0 %744
        %748 = vset.pattern.permute.xlu0 0
        %749 = vperm.xlu0 %748, %v282
        %v750 = vpop.permute.xlu0 %749
        %753 = vset.pattern.permute.xlu0 0
        %754 = vperm.xlu0 %753, %v283
        %v755 = vpop.permute.xlu0 %754
        %758 = vset.pattern.permute.xlu0 0
        %759 = vperm.xlu0 %758, %v284
        %v760 = vpop.permute.xlu0 %759
        %763 = vset.pattern.permute.xlu0 0
        %764 = vperm.xlu0 %763, %v285
        %v765 = vpop.permute.xlu0 %764
        %768 = vset.pattern.permute.xlu0 0
        %769 = vperm.xlu0 %768, %v286
        %v770 = vpop.permute.xlu0 %769
        %773 = vset.pattern.permute.xlu0 0
        %774 = vperm.xlu0 %773, %v287
        %v775 = vpop.permute.xlu0 %774
        %778 = vset.pattern.permute.xlu0 0
        %779 = vperm.xlu0 %778, %v288
        %v780 = vpop.permute.xlu0 %779
        %783 = vset.pattern.permute.xlu0 0
        %784 = vperm.xlu0 %783, %v289
        %v785 = vpop.permute.xlu0 %784
        %788 = vset.pattern.permute.xlu0 0
        %789 = vperm.xlu0 %788, %v290
        %v790 = vpop.permute.xlu0 %789
        %793 = vset.pattern.permute.xlu0 0
        %794 = vperm.xlu0 %793, %v291
        %v795 = vpop.permute.xlu0 %794
        %798 = vset.pattern.permute.xlu0 0
        %799 = vperm.xlu0 %798, %v292
        %v800 = vpop.permute.xlu0 %799
        %803 = vset.pattern.permute.xlu0 0
        %804 = vperm.xlu0 %803, %v293
        %v805 = vpop.permute.xlu0 %804
        %808 = vset.pattern.permute.xlu0 0
        %809 = vperm.xlu0 %808, %v294
        %v810 = vpop.permute.xlu0 %809
        %813 = vset.pattern.permute.xlu0 0
        %814 = vperm.xlu0 %813, %v295
        %v815 = vpop.permute.xlu0 %814
        %818 = vset.pattern.permute.xlu0 0
        %819 = vperm.xlu0 %818, %v296
        %v820 = vpop.permute.xlu0 %819
        %823 = vset.pattern.permute.xlu0 0
        %824 = vperm.xlu0 %823, %v297
        %v825 = vpop.permute.xlu0 %824
        %v851 = vunpack.c.l.b16 %v679
        %v852 = vunpack.c.l.b16 %v680
        %v853 = vunpack.c.l.b16 %v681
        %v854 = vunpack.c.l.b16 %v682
        %v855 = vunpack.c.l.b16 %v683
        %v856 = vunpack.c.l.b16 %v684
        %v857 = vunpack.c.l.b16 %v685
        %v858 = vunpack.c.l.b16 %v686
        %v859 = vunpack.c.l.b16 %v687
        %v860 = vunpack.c.l.b16 %v688
        %v861 = vunpack.c.l.b16 %v689
        %v862 = vunpack.c.l.b16 %v690
        %v863 = vunpack.c.l.b16 %v691
        %v864 = vunpack.c.l.b16 %v692
        %v865 = vunpack.c.l.b16 %v693
        %v866 = vunpack.c.l.b16 %v694
        %v867 = vunpack.c.l.b16 %v695
        %v868 = vunpack.c.l.b16 %v696
        %v869 = vunpack.c.l.b16 %v697
        %v870 = vunpack.c.l.b16 %v698
        %v871 = vunpack.c.l.b16 %v699
        %v872 = vunpack.c.l.b16 %v700
        %v873 = vunpack.c.l.b16 %v701
        %v874 = vunpack.c.l.b16 %v702
        %v875 = vpack.c.b16 %v852, %v851
        %v876 = vpack.c.b16 %v854, %v853
        %v877 = vpack.c.b16 %v856, %v855
        %v878 = vpack.c.b16 %v858, %v857
        %v879 = vpack.c.b16 %v860, %v859
        %v880 = vpack.c.b16 %v862, %v861
        %v881 = vpack.c.b16 %v864, %v863
        %v882 = vpack.c.b16 %v866, %v865
        %v883 = vpack.c.b16 %v868, %v867
        %v884 = vpack.c.b16 %v870, %v869
        %v885 = vpack.c.b16 %v872, %v871
        %v886 = vpack.c.b16 %v874, %v873
        %v888 = vsel %vm407, %v875, 0
        %v891 = vsel %vm407, %v876, 0
        %v894 = vsel %vm407, %v877, 0
        %v897 = vsel %vm407, %v878, 0
        %v900 = vsel %vm407, %v879, 0
        %v903 = vsel %vm407, %v880, 0
        %v906 = vsel %vm407, %v881, 0
        %v909 = vsel %vm407, %v882, 0
        %v912 = vsel %vm407, %v883, 0
        %v915 = vsel %vm407, %v884, 0
        %v918 = vsel %vm407, %v885, 0
        %v921 = vsel %vm407, %v886, 0
        %923 = vmatpush.bf16.msra.mxu0 0
        %924 = vmatpush.bf16.msra.mxu0 0
        %925 = vmatpush.bf16.msra.mxu0 0
        %926 = vmatpush.bf16.msra.mxu0 0
        %927 = vmatpush.bf16.msra.mxu0 %v706
        %928 = vmatpush.bf16.msra.mxu0 %v705
        %929 = vmatpush.bf16.msra.mxu0 %v704
        %930 = vmatpush.bf16.msra.mxu0 %v703
        %931 = vmatmul.bf16.gmra.mxu0 %v888
        %v932 = vpop.f32.mrf.mxu0
        %v933 = vadd.f32 %v710, %v932
        %v934 = vpop.f32.mrf.mxu0
        %v935 = vadd.f32 %v715, %v934
        %936 = vmatmul.bf16.gmra.mxu0 %v891
        %v937 = vpop.f32.mrf.mxu0
        %v938 = vadd.f32 %v720, %v937
        %v939 = vpop.f32.mrf.mxu0
        %v940 = vadd.f32 %v725, %v939
        %941 = vmatmul.bf16.gmra.mxu0 %v894
        %v942 = vpop.f32.mrf.mxu0
        %v943 = vadd.f32 %v730, %v942
        %v944 = vpop.f32.mrf.mxu0
        %v945 = vadd.f32 %v735, %v944
        %946 = vmatmul.bf16.gmra.mxu0 %v897
        %v947 = vpop.f32.mrf.mxu0
        %v948 = vadd.f32 %v740, %v947
        %v949 = vpop.f32.mrf.mxu0
        %v950 = vadd.f32 %v745, %v949
        %951 = vmatmul.bf16.gmra.mxu0 %v900
        %v952 = vpop.f32.mrf.mxu0
        %v953 = vadd.f32 %v750, %v952
        %v954 = vpop.f32.mrf.mxu0
        %v955 = vadd.f32 %v755, %v954
        %956 = vmatmul.bf16.gmra.mxu0 %v903
        %v957 = vpop.f32.mrf.mxu0
        %v958 = vadd.f32 %v760, %v957
        %v959 = vpop.f32.mrf.mxu0
        %v960 = vadd.f32 %v765, %v959
        %961 = vmatmul.bf16.gmra.mxu0 %v906
        %v962 = vpop.f32.mrf.mxu0
        %v963 = vadd.f32 %v770, %v962
        %v964 = vpop.f32.mrf.mxu0
        %v965 = vadd.f32 %v775, %v964
        %966 = vmatmul.bf16.gmra.mxu0 %v909
        %v967 = vpop.f32.mrf.mxu0
        %v968 = vadd.f32 %v780, %v967
        %v969 = vpop.f32.mrf.mxu0
        %v970 = vadd.f32 %v785, %v969
        %971 = vmatmul.bf16.gmra.mxu0 %v912
        %v972 = vpop.f32.mrf.mxu0
        %v973 = vadd.f32 %v790, %v972
        %v974 = vpop.f32.mrf.mxu0
        %v975 = vadd.f32 %v795, %v974
        %976 = vmatmul.bf16.gmra.mxu0 %v915
        %v977 = vpop.f32.mrf.mxu0
        %v978 = vadd.f32 %v800, %v977
        %v979 = vpop.f32.mrf.mxu0
        %v980 = vadd.f32 %v805, %v979
        %981 = vmatmul.bf16.gmra.mxu0 %v918
        %v982 = vpop.f32.mrf.mxu0
        %v983 = vadd.f32 %v810, %v982
        %v984 = vpop.f32.mrf.mxu0
        %v985 = vadd.f32 %v815, %v984
        %986 = vmatmul.bf16.gmra.mxu0 %v921
        %v987 = vpop.f32.mrf.mxu0
        %v988 = vadd.f32 %v820, %v987
        %v989 = vpop.f32.mrf.mxu0
        %v990 = vadd.f32 %v825, %v989
        %991 = vdwg.mxu0
        %v992 = vpack.c.bf16 %v933, %v933
        %v993 = vpack.c.bf16 %v935, %v935
        %v994 = vpack.c.bf16 %v938, %v938
        %v995 = vpack.c.bf16 %v940, %v940
        %v996 = vpack.c.bf16 %v943, %v943
        %v997 = vpack.c.bf16 %v945, %v945
        %v998 = vpack.c.bf16 %v948, %v948
        %v999 = vpack.c.bf16 %v950, %v950
        %1000 = vst [vmem:[#allocation2] sm:$0xf] %v992
        %1001 = vst [vmem:[#allocation2 + $0x4] sm:$0xf] %v993
        %1002 = vst [vmem:[#allocation2 + $0x8] sm:$0xf] %v994
        %1003 = vst [vmem:[#allocation2 + $0xc] sm:$0xf] %v995
        %1004 = vst [vmem:[#allocation2 + $0x10] sm:$0xf] %v996
        %1005 = vst [vmem:[#allocation2 + $0x14] sm:$0xf] %v997
        %1006 = vst [vmem:[#allocation2 + $0x18] sm:$0xf] %v998
        %1007 = vst [vmem:[#allocation2 + $0x1c] sm:$0xf] %v999
        %v1008 = vpack.c.bf16 %v953, %v953
        %v1009 = vpack.c.bf16 %v955, %v955
        %v1010 = vpack.c.bf16 %v958, %v958
        %v1011 = vpack.c.bf16 %v960, %v960
        %v1012 = vpack.c.bf16 %v963, %v963
        %v1013 = vpack.c.bf16 %v965, %v965
        %v1014 = vpack.c.bf16 %v968, %v968
        %v1015 = vpack.c.bf16 %v970, %v970
        %1016 = vst [vmem:[#allocation3] sm:$0xf] %v1008
        %1017 = vst [vmem:[#allocation3 + $0x4] sm:$0xf] %v1009
        %1018 = vst [vmem:[#allocation3 + $0x8] sm:$0xf] %v1010
        %1019 = vst [vmem:[#allocation3 + $0xc] sm:$0xf] %v1011
        %1020 = vst [vmem:[#allocation3 + $0x10] sm:$0xf] %v1012
        %1021 = vst [vmem:[#allocation3 + $0x14] sm:$0xf] %v1013
        %1022 = vst [vmem:[#allocation3 + $0x18] sm:$0xf] %v1014
        %1023 = vst [vmem:[#allocation3 + $0x1c] sm:$0xf] %v1015
        %v1024 = vpack.c.bf16 %v973, %v973
        %v1025 = vpack.c.bf16 %v975, %v975
        %v1026 = vpack.c.bf16 %v978, %v978
        %v1027 = vpack.c.bf16 %v980, %v980
        %v1028 = vpack.c.bf16 %v983, %v983
        %v1029 = vpack.c.bf16 %v985, %v985
        %v1030 = vpack.c.bf16 %v988, %v988
        %v1031 = vpack.c.bf16 %v990, %v990
        %1032 = vst [vmem:[#allocation4] sm:$0xf] %v1024
        %1033 = vst [vmem:[#allocation4 + $0x4] sm:$0xf] %v1025
        %1034 = vst [vmem:[#allocation4 + $0x8] sm:$0xf] %v1026
        %1035 = vst [vmem:[#allocation4 + $0xc] sm:$0xf] %v1027
        %1036 = vst [vmem:[#allocation4 + $0x10] sm:$0xf] %v1028
        %1037 = vst [vmem:[#allocation4 + $0x14] sm:$0xf] %v1029
        %1038 = vst [vmem:[#allocation4 + $0x18] sm:$0xf] %v1030
        %1039 = vst [vmem:[#allocation4 + $0x1c] sm:$0xf] %v1031
      $region48: #{attn_block.1} parent=43 // pred_fallthru
        _
      %s1040 = smul.u32 %s22, 128
      %s1041 = sshra.s32 %s1040, 7
      %s1042 = sand.u32 %s1040, 127
      %s1043 = smul.addr %s1041, 4
      %s1044 = scalar_lea.vmem [#allocation2], %s1043
      %v1045 = vld [vmem:[%s1044] sm:$0xf]
      %v1046 = vld [vmem:[%s1044 + $0x4] sm:$0xf]
      %v1047 = vld [vmem:[%s1044 + $0x8] sm:$0xf]
      %v1048 = vld [vmem:[%s1044 + $0xc] sm:$0xf]
      %v1049 = vld [vmem:[%s1044 + $0x10] sm:$0xf]
      %v1050 = vld [vmem:[%s1044 + $0x14] sm:$0xf]
      %v1051 = vld [vmem:[%s1044 + $0x18] sm:$0xf]
      %v1052 = vld [vmem:[%s1044 + $0x1c] sm:$0xf]
      %v1053 = vld [vmem:[#allocation3] sm:$0xf]
      %v1054 = vld [vmem:[#allocation3 + $0x4] sm:$0xf]
      %v1055 = vld [vmem:[#allocation3 + $0x8] sm:$0xf]
      %v1056 = vld [vmem:[#allocation3 + $0xc] sm:$0xf]
      %v1057 = vld [vmem:[#allocation3 + $0x10] sm:$0xf]
      %v1058 = vld [vmem:[#allocation3 + $0x14] sm:$0xf]
      %v1059 = vld [vmem:[#allocation3 + $0x18] sm:$0xf]
      %v1060 = vld [vmem:[#allocation3 + $0x1c] sm:$0xf]
      %v1061 = vld [vmem:[%s1] sm:$0x1]
      %v1063 = vperm.slane %v1061, 0
      %v1073 = vunpack.c.l.b16 %v1045
      %v1074 = vunpack.c.l.b16 %v1046
      %v1075 = vunpack.c.l.b16 %v1047
      %v1076 = vunpack.c.l.b16 %v1048
      %v1077 = vunpack.c.l.b16 %v1049
      %v1078 = vunpack.c.l.b16 %v1050
      %v1079 = vunpack.c.l.b16 %v1051
      %v1080 = vunpack.c.l.b16 %v1052
      %v1081 = vpack.c.b16 %v1074, %v1073
      %v1082 = vpack.c.b16 %v1076, %v1075
      %v1083 = vpack.c.b16 %v1078, %v1077
      %v1084 = vpack.c.b16 %v1080, %v1079
      %1089 = vxpose.xlu0.c.b16.start [1/8] %v1081, 128
      %1090 = vxpose.xlu0.c.b16.cont [2/8] %v1082, 128
      %1091 = vxpose.xlu0.c.b16.cont [3/8] %v1083, 128
      %1092 = vxpose.xlu0.c.b16.cont [4/8] %v1084, 128
      %1093 = vxpose.xlu0.c.b16.cont [5/8] 0, 128
      %1094 = vxpose.xlu0.c.b16.cont [6/8] 0, 128
      %1095 = vxpose.xlu0.c.b16.cont [7/8] 0, 128
      %1096 = vxpose.xlu0.c.b16.end [8/8] 0, 128
      %v1097 = vpop.trf.xlu0
      %v1098 = vpop.trf.xlu0
      %v1099 = vpop.trf.xlu0
      %v1100 = vpop.trf.xlu0
      %v1101 = vpop.trf.xlu0
      %v1102 = vpop.trf.xlu0
      %v1103 = vpop.trf.xlu0
      %v1104 = vpop.trf.xlu0
      %v1113 = vunpack.c.l.b16 %v1053
      %v1114 = vunpack.c.l.b16 %v1054
      %v1115 = vunpack.c.l.b16 %v1055
      %v1116 = vunpack.c.l.b16 %v1056
      %v1117 = vunpack.c.l.b16 %v1057
      %v1118 = vunpack.c.l.b16 %v1058
      %v1119 = vunpack.c.l.b16 %v1059
      %v1120 = vunpack.c.l.b16 %v1060
      %v1121 = vpack.c.b16 %v1114, %v1113
      %v1122 = vpack.c.b16 %v1116, %v1115
      %v1123 = vpack.c.b16 %v1118, %v1117
      %v1124 = vpack.c.b16 %v1120, %v1119
      %vm1129 = vcmask 523264
      %v1131 = vsel %vm1129, %v1097, 0
      %v1134 = vsel %vm1129, %v1098, 0
      %v1137 = vsel %vm1129, %v1099, 0
      %v1140 = vsel %vm1129, %v1100, 0
      %v1143 = vsel %vm1129, %v1101, 0
      %v1146 = vsel %vm1129, %v1102, 0
      %v1149 = vsel %vm1129, %v1103, 0
      %v1152 = vsel %vm1129, %v1104, 0
      %1154 = vmatpush.bf16.msra.mxu0 0
      %1155 = vmatpush.bf16.msra.mxu0 0
      %1156 = vmatpush.bf16.msra.mxu0 0
      %1157 = vmatpush.bf16.msra.mxu0 0
      %1158 = vmatpush.bf16.msra.mxu0 %v1124
      %1159 = vmatpush.bf16.msra.mxu0 %v1123
      %1160 = vmatpush.bf16.msra.mxu0 %v1122
      %1161 = vmatpush.bf16.msra.mxu0 %v1121
      %1162 = vmatmul.bf16.gmra.mxu0 %v1131
      %v1163 = vpop.f32.mrf.mxu0
      %v1164 = vadd.f32 %v1063, %v1163
      %v1165 = vpop.f32.mrf.mxu0
      %v1166 = vadd.f32 %v1063, %v1165
      %1167 = vmatmul.bf16.gmra.mxu0 %v1134
      %v1168 = vpop.f32.mrf.mxu0
      %v1169 = vadd.f32 %v1063, %v1168
      %v1170 = vpop.f32.mrf.mxu0
      %v1171 = vadd.f32 %v1063, %v1170
      %1172 = vmatmul.bf16.gmra.mxu0 %v1137
      %v1173 = vpop.f32.mrf.mxu0
      %v1174 = vadd.f32 %v1063, %v1173
      %v1175 = vpop.f32.mrf.mxu0
      %v1176 = vadd.f32 %v1063, %v1175
      %1177 = vmatmul.bf16.gmra.mxu0 %v1140
      %v1178 = vpop.f32.mrf.mxu0
      %v1179 = vadd.f32 %v1063, %v1178
      %v1180 = vpop.f32.mrf.mxu0
      %v1181 = vadd.f32 %v1063, %v1180
      %1182 = vmatmul.bf16.gmra.mxu0 %v1143
      %v1183 = vpop.f32.mrf.mxu0
      %v1184 = vadd.f32 %v1063, %v1183
      %v1185 = vpop.f32.mrf.mxu0
      %v1186 = vadd.f32 %v1063, %v1185
      %1187 = vmatmul.bf16.gmra.mxu0 %v1146
      %v1188 = vpop.f32.mrf.mxu0
      %v1189 = vadd.f32 %v1063, %v1188
      %v1190 = vpop.f32.mrf.mxu0
      %v1191 = vadd.f32 %v1063, %v1190
      %1192 = vmatmul.bf16.gmra.mxu0 %v1149
      %v1193 = vpop.f32.mrf.mxu0
      %v1194 = vadd.f32 %v1063, %v1193
      %v1195 = vpop.f32.mrf.mxu0
      %v1196 = vadd.f32 %v1063, %v1195
      %1197 = vmatmul.bf16.gmra.mxu0 %v1152
      %v1198 = vpop.f32.mrf.mxu0
      %v1199 = vadd.f32 %v1063, %v1198
      %v1200 = vpop.f32.mrf.mxu0
      %v1201 = vadd.f32 %v1063, %v1200
      %1202 = vdwg.mxu0
      %1203 = vmax.xlane.f32.xlu0 %v1164
      %v1204 = vpop.xlane.xlu0 %1203
      %1205 = vmax.xlane.f32.xlu0 %v1166
      %v1206 = vpop.xlane.xlu0 %1205
      %1207 = vmax.xlane.f32.xlu0 %v1169
      %v1208 = vpop.xlane.xlu0 %1207
      %1209 = vmax.xlane.f32.xlu0 %v1171
      %v1210 = vpop.xlane.xlu0 %1209
      %1211 = vmax.xlane.f32.xlu0 %v1174
      %v1212 = vpop.xlane.xlu0 %1211
      %1213 = vmax.xlane.f32.xlu0 %v1176
      %v1214 = vpop.xlane.xlu0 %1213
      %1215 = vmax.xlane.f32.xlu0 %v1179
      %v1216 = vpop.xlane.xlu0 %1215
      %1217 = vmax.xlane.f32.xlu0 %v1181
      %v1218 = vpop.xlane.xlu0 %1217
      %1219 = vmax.xlane.f32.xlu0 %v1184
      %v1220 = vpop.xlane.xlu0 %1219
      %1221 = vmax.xlane.f32.xlu0 %v1186
      %v1222 = vpop.xlane.xlu0 %1221
      %1223 = vmax.xlane.f32.xlu0 %v1189
      %v1224 = vpop.xlane.xlu0 %1223
      %1225 = vmax.xlane.f32.xlu0 %v1191
      %v1226 = vpop.xlane.xlu0 %1225
      %1227 = vmax.xlane.f32.xlu0 %v1194
      %v1228 = vpop.xlane.xlu0 %1227
      %1229 = vmax.xlane.f32.xlu0 %v1196
      %v1230 = vpop.xlane.xlu0 %1229
      %1231 = vmax.xlane.f32.xlu0 %v1199
      %v1232 = vpop.xlane.xlu0 %1231
      %1233 = vmax.xlane.f32.xlu0 %v1201
      %v1234 = vpop.xlane.xlu0 %1233
      %v1235 = vsub.f32 %v1164, %v1204
      %v1236 = vsub.f32 %v1166, %v1206
      %v1237 = vsub.f32 %v1169, %v1208
      %v1238 = vsub.f32 %v1171, %v1210
      %v1239 = vsub.f32 %v1174, %v1212
      %v1240 = vsub.f32 %v1176, %v1214
      %v1241 = vsub.f32 %v1179, %v1216
      %v1242 = vsub.f32 %v1181, %v1218
      %v1243 = vsub.f32 %v1184, %v1220
      %v1244 = vsub.f32 %v1186, %v1222
      %v1245 = vsub.f32 %v1189, %v1224
      %v1246 = vsub.f32 %v1191, %v1226
      %v1247 = vsub.f32 %v1194, %v1228
      %v1248 = vsub.f32 %v1196, %v1230
      %v1249 = vsub.f32 %v1199, %v1232
      %v1250 = vsub.f32 %v1201, %v1234
      %v1251 = vmul.f32 %v1235, 1.442695
      %v1252 = vpow.pop %v1251
      %v1253 = vmul.f32 %v1236, 1.442695
      %v1254 = vpow.pop %v1253
      %v1255 = vmul.f32 %v1237, 1.442695
      %v1256 = vpow.pop %v1255
      %v1257 = vmul.f32 %v1238, 1.442695
      %v1258 = vpow.pop %v1257
      %v1259 = vmul.f32 %v1239, 1.442695
      %v1260 = vpow.pop %v1259
      %v1261 = vmul.f32 %v1240, 1.442695
      %v1262 = vpow.pop %v1261
      %v1263 = vmul.f32 %v1241, 1.442695
      %v1264 = vpow.pop %v1263
      %v1265 = vmul.f32 %v1242, 1.442695
      %v1266 = vpow.pop %v1265
      %v1267 = vmul.f32 %v1243, 1.442695
      %v1268 = vpow.pop %v1267
      %v1269 = vmul.f32 %v1244, 1.442695
      %v1270 = vpow.pop %v1269
      %v1271 = vmul.f32 %v1245, 1.442695
      %v1272 = vpow.pop %v1271
      %v1273 = vmul.f32 %v1246, 1.442695
      %v1274 = vpow.pop %v1273
      %v1275 = vmul.f32 %v1247, 1.442695
      %v1276 = vpow.pop %v1275
      %v1277 = vmul.f32 %v1248, 1.442695
      %v1278 = vpow.pop %v1277
      %v1279 = vmul.f32 %v1249, 1.442695
      %v1280 = vpow.pop %v1279
      %v1281 = vmul.f32 %v1250, 1.442695
      %v1282 = vpow.pop %v1281
      %v1283 = vpack.c.bf16 %v1254, %v1252
      %v1284 = vpack.c.bf16 %v1258, %v1256
      %v1285 = vpack.c.bf16 %v1262, %v1260
      %v1286 = vpack.c.bf16 %v1266, %v1264
      %v1287 = vpack.c.bf16 %v1270, %v1268
      %v1288 = vpack.c.bf16 %v1274, %v1272
      %v1289 = vpack.c.bf16 %v1278, %v1276
      %v1290 = vpack.c.bf16 %v1282, %v1280
      %v1291 = vld [vmem:[#allocation4] sm:$0xf]
      %v1292 = vld [vmem:[#allocation4 + $0x4] sm:$0xf]
      %v1293 = vld [vmem:[#allocation4 + $0x8] sm:$0xf]
      %v1294 = vld [vmem:[#allocation4 + $0xc] sm:$0xf]
      %v1295 = vld [vmem:[#allocation4 + $0x10] sm:$0xf]
      %v1296 = vld [vmem:[#allocation4 + $0x14] sm:$0xf]
      %v1297 = vld [vmem:[#allocation4 + $0x18] sm:$0xf]
      %v1298 = vld [vmem:[#allocation4 + $0x1c] sm:$0xf]
      %v1307 = vunpack.c.l.b16 %v1291
      %v1308 = vunpack.c.l.b16 %v1292
      %v1309 = vunpack.c.l.b16 %v1293
      %v1310 = vunpack.c.l.b16 %v1294
      %v1311 = vunpack.c.l.b16 %v1295
      %v1312 = vunpack.c.l.b16 %v1296
      %v1313 = vunpack.c.l.b16 %v1297
      %v1314 = vunpack.c.l.b16 %v1298
      %v1315 = vpack.c.b16 %v1308, %v1307
      %v1316 = vpack.c.b16 %v1310, %v1309
      %v1317 = vpack.c.b16 %v1312, %v1311
      %v1318 = vpack.c.b16 %v1314, %v1313
      %1323 = vmatpush.bf16.xpose.msra.mxu0 %v1290
      %1324 = vmatpush.bf16.xpose.msra.mxu0 %v1289
      %1325 = vmatpush.bf16.xpose.msra.mxu0 %v1288
      %1326 = vmatpush.bf16.xpose.msra.mxu0 %v1287
      %1327 = vmatpush.bf16.xpose.msra.mxu0 %v1286
      %1328 = vmatpush.bf16.xpose.msra.mxu0 %v1285
      %1329 = vmatpush.bf16.xpose.msra.mxu0 %v1284
      %1330 = vmatpush.bf16.xpose.msra.mxu0 %v1283
      %1331 = vmatmul.bf16.gmra.mxu0 %v1315
      %v1332 = vpop.f32.mrf.mxu0
      %v1333 = vadd.f32 0.0, %v1332
      %v1334 = vpop.f32.mrf.mxu0
      %v1335 = vadd.f32 0.0, %v1334
      %1336 = vmatmul.bf16.gmra.mxu0 %v1316
      %v1337 = vpop.f32.mrf.mxu0
      %v1338 = vadd.f32 0.0, %v1337
      %v1339 = vpop.f32.mrf.mxu0
      %v1340 = vadd.f32 0.0, %v1339
      %1341 = vmatmul.bf16.gmra.mxu0 %v1317
      %v1342 = vpop.f32.mrf.mxu0
      %v1343 = vadd.f32 0.0, %v1342
      %v1344 = vpop.f32.mrf.mxu0
      %v1345 = vadd.f32 0.0, %v1344
      %1346 = vmatmul.bf16.gmra.mxu0 %v1318
      %v1347 = vpop.f32.mrf.mxu0
      %v1348 = vadd.f32 0.0, %v1347
      %v1349 = vpop.f32.mrf.mxu0
      %v1350 = vadd.f32 0.0, %v1349
      %1351 = vdwg.mxu0
      %1352 = vmatpush.bf16.xpose.msra.mxu0 %v1290
      %1353 = vmatpush.bf16.xpose.msra.mxu0 %v1289
      %1354 = vmatpush.bf16.xpose.msra.mxu0 %v1288
      %1355 = vmatpush.bf16.xpose.msra.mxu0 %v1287
      %1356 = vmatpush.bf16.xpose.msra.mxu0 %v1286
      %1357 = vmatpush.bf16.xpose.msra.mxu0 %v1285
      %1358 = vmatpush.bf16.xpose.msra.mxu0 %v1284
      %1359 = vmatpush.bf16.xpose.msra.mxu0 %v1283
      %1360 = vmatmul.bf16.gmra.mxu0 1065369472
      %v1361 = vpop.f32.mrf.mxu0
      %v1362 = vadd.f32 0.0, %v1361
      %v1363 = vpop.f32.mrf.mxu0
      %1364 = vdwg.mxu0
      %v1365 = vrcp.pop %v1362
      %v1366 = vperm.slane %v1365, 0
      %v1367 = vmul.f32 %v1333, %v1366
      %v1368 = vmul.f32 %v1335, %v1366
      %v1369 = vmul.f32 %v1338, %v1366
      %v1370 = vmul.f32 %v1340, %v1366
      %v1371 = vmul.f32 %v1343, %v1366
      %v1372 = vmul.f32 %v1345, %v1366
      %v1373 = vmul.f32 %v1348, %v1366
      %v1374 = vmul.f32 %v1350, %v1366
      %v1375 = vld [vmem:[%s4] sm:$0xf]
      %v1376 = vld [vmem:[%s4 + $0x4] sm:$0xf]
      %v1377 = vld [vmem:[%s4 + $0x8] sm:$0xf]
      %v1378 = vld [vmem:[%s4 + $0xc] sm:$0xf]
      %v1379 = vld [vmem:[%s4 + $0x10] sm:$0xf]
      %v1380 = vld [vmem:[%s4 + $0x14] sm:$0xf]
      %v1381 = vld [vmem:[%s4 + $0x18] sm:$0xf]
      %v1382 = vld [vmem:[%s4 + $0x1c] sm:$0xf]
      %v1383 = vpack.c.bf16 %v1368, %v1367
      %v1384 = vpack.c.bf16 %v1370, %v1369
      %v1385 = vpack.c.bf16 %v1372, %v1371
      %v1386 = vpack.c.bf16 %v1374, %v1373
      %1388 = vset.pattern.permute.xlu0 0
      %1389 = vperm.xlu0 %1388, %v298
      %v1390 = vpop.permute.xlu0 %1389
      %1393 = vset.pattern.permute.xlu0 0
      %1394 = vperm.xlu0 %1393, %v299
      %v1395 = vpop.permute.xlu0 %1394
      %1398 = vset.pattern.permute.xlu0 0
      %1399 = vperm.xlu0 %1398, %v300
      %v1400 = vpop.permute.xlu0 %1399
      %1403 = vset.pattern.permute.xlu0 0
      %1404 = vperm.xlu0 %1403, %v301
      %v1405 = vpop.permute.xlu0 %1404
      %1408 = vset.pattern.permute.xlu0 0
      %1409 = vperm.xlu0 %1408, %v302
      %v1410 = vpop.permute.xlu0 %1409
      %1413 = vset.pattern.permute.xlu0 0
      %1414 = vperm.xlu0 %1413, %v303
      %v1415 = vpop.permute.xlu0 %1414
      %1418 = vset.pattern.permute.xlu0 0
      %1419 = vperm.xlu0 %1418, %v304
      %v1420 = vpop.permute.xlu0 %1419
      %1423 = vset.pattern.permute.xlu0 0
      %1424 = vperm.xlu0 %1423, %v305
      %v1425 = vpop.permute.xlu0 %1424
      %v1435 = vunpack.c.l.b16 %v1375
      %v1436 = vunpack.c.l.b16 %v1376
      %v1437 = vunpack.c.l.b16 %v1377
      %v1438 = vunpack.c.l.b16 %v1378
      %v1439 = vunpack.c.l.b16 %v1379
      %v1440 = vunpack.c.l.b16 %v1380
      %v1441 = vunpack.c.l.b16 %v1381
      %v1442 = vunpack.c.l.b16 %v1382
      %v1443 = vpack.c.b16 %v1436, %v1435
      %v1444 = vpack.c.b16 %v1438, %v1437
      %v1445 = vpack.c.b16 %v1440, %v1439
      %v1446 = vpack.c.b16 %v1442, %v1441
      %v1448 = vsel %vm1129, %v1443, 0
      %v1451 = vsel %vm1129, %v1444, 0
      %v1454 = vsel %vm1129, %v1445, 0
      %v1457 = vsel %vm1129, %v1446, 0
      %1459 = vmatpush.bf16.msra.mxu0 0
      %1460 = vmatpush.bf16.msra.mxu0 0
      %1461 = vmatpush.bf16.msra.mxu0 0
      %1462 = vmatpush.bf16.msra.mxu0 0
      %1463 = vmatpush.bf16.msra.mxu0 %v1386
      %1464 = vmatpush.bf16.msra.mxu0 %v1385
      %1465 = vmatpush.bf16.msra.mxu0 %v1384
      %1466 = vmatpush.bf16.msra.mxu0 %v1383
      %1467 = vmatmul.bf16.gmra.mxu0 %v1448
      %v1468 = vpop.f32.mrf.mxu0
      %v1469 = vadd.f32 %v1390, %v1468
      %v1470 = vpop.f32.mrf.mxu0
      %v1471 = vadd.f32 %v1395, %v1470
      %1472 = vmatmul.bf16.gmra.mxu0 %v1451
      %v1473 = vpop.f32.mrf.mxu0
      %v1474 = vadd.f32 %v1400, %v1473
      %v1475 = vpop.f32.mrf.mxu0
      %v1476 = vadd.f32 %v1405, %v1475
      %1477 = vmatmul.bf16.gmra.mxu0 %v1454
      %v1478 = vpop.f32.mrf.mxu0
      %v1479 = vadd.f32 %v1410, %v1478
      %v1480 = vpop.f32.mrf.mxu0
      %v1481 = vadd.f32 %v1415, %v1480
      %1482 = vmatmul.bf16.gmra.mxu0 %v1457
      %v1483 = vpop.f32.mrf.mxu0
      %v1484 = vadd.f32 %v1420, %v1483
      %v1485 = vpop.f32.mrf.mxu0
      %v1486 = vadd.f32 %v1425, %v1485
      %1487 = vdwg.mxu0
      %s1488 = scalar_lea.vmem %s263, %s1041
      %v1489 = vld [vmem:[%s1488] sm:$0xff]
      %v1490 = vld [vmem:[%s1488 + $0x8] sm:$0xff]
      %v1491 = vld [vmem:[%s1488 + $0x10] sm:$0xff]
      %v1492 = vld [vmem:[%s1488 + $0x18] sm:$0xff]
      %v1493 = vld [vmem:[%s1488 + $0x20] sm:$0xff]
      %v1494 = vld [vmem:[%s1488 + $0x28] sm:$0xff]
      %v1495 = vld [vmem:[%s1488 + $0x30] sm:$0xff]
      %v1496 = vld [vmem:[%s1488 + $0x38] sm:$0xff]
      %v1497 = vadd.f32 %v1489, %v1469
      %v1498 = vadd.f32 %v1490, %v1471
      %v1499 = vadd.f32 %v1491, %v1474
      %v1500 = vadd.f32 %v1492, %v1476
      %v1501 = vadd.f32 %v1493, %v1479
      %v1502 = vadd.f32 %v1494, %v1481
      %v1503 = vadd.f32 %v1495, %v1484
      %v1504 = vadd.f32 %v1496, %v1486
      %1505 = vst [vmem:[%s271] sm:$0xff] %v1497
      %1506 = vst [vmem:[%s271 + $0x8] sm:$0xff] %v1498
      %1507 = vst [vmem:[%s271 + $0x10] sm:$0xff] %v1499
      %1508 = vst [vmem:[%s271 + $0x18] sm:$0xff] %v1500
      %1509 = vst [vmem:[%s271 + $0x20] sm:$0xff] %v1501
      %1510 = vst [vmem:[%s271 + $0x28] sm:$0xff] %v1502
      %1511 = vst [vmem:[%s271 + $0x30] sm:$0xff] %v1503
      %1512 = vst [vmem:[%s271 + $0x38] sm:$0xff] %v1504
      %p1513 = scmp.lt.s32.totalorder %s21, 1
      %s1514 = scalar_select %p1513, %s21, 1
      %p1515 = scmp.lt.s32.totalorder %s22, 0
      %s1516 = scalar_select %p1515, %s22, 0
      %s1517 = smul.addr %s1514, 8
      %s1518 = sadd.s32 %s1516, %s1517
      %s1519 = smul.addr %s1518, 8
      %s1520 = scalar_lea.vmem %s6, %s1519
      // Predicated region
      $region49: #{attn_block.1} parent=43 // pred_check
        %p1521 = pneg %p180
      $region50: #{attn_block.1} parent=43 // pred_check_branch
        %1523 = sbr.rel (%p1521) target = $region52
      $region51: #{attn_block.1} parent=43 // pred_region
        _
      $region52: #{attn_block.1} parent=43 // pred_fallthru
        _
    $region44: #{attn_block.1} parent=5 // pred_fallthru
      _
    %p1524 = scmp.le.s32.totalorder 2, %s12
    // Predicated region
    $region53: #{attn_block.1} parent=5 // pred_check
      %p1525 = pneg %p1524
    $region54: #{attn_block.1} parent=5 // pred_check_branch
      %1527 = sbr.rel (%p1525) target = $region56
    $region55: #{attn_block.1} parent=5 // pred_region
      %s1528 = ssub.s32 %s12, 2
      // Predicated region
      $region57: #{attn_block.1} parent=55 // pred_check
        %p1529 = pneg %p186
      $region58: #{attn_block.1} parent=55 // pred_check_branch
        %1531 = sbr.rel (%p1529) target = $region60
      $region59: #{attn_block.1} parent=55 // pred_region
        %p1532 = scmp.lt.s32.totalorder %s23, 1
        %s1533 = scalar_select %p1532, %s23, 1
        %p1534 = scmp.lt.s32.totalorder %s24, 0
        %s1535 = scalar_select %p1534, %s24, 0
        %s1536 = smul.addr %s1533, 8
        %s1537 = sadd.s32 %s1535, %s1536
        %s1538 = smul.addr %s1537, 8
        %s1539 = scalar_lea.vmem %s6, %s1538
      $region60: #{attn_block.1} parent=55 // pred_fallthru
        _
    $region56: #{attn_block.1} parent=5 // pred_fallthru
      _
  $region6: #{attn_block.1} parent=0 // loop_footer
    %s16 = sadd.s32 1, %s12
  $region7: #{attn_block.1} parent=0 // loop_footer_branch
    %11 = sbr.rel target = $region3
  $region8: #{attn_block.1} parent=0 // loop_exit
    _

</llo_original>
